<compile_context>
chip_gen: v5e
topology: v5e:2x2
jax: 0.10.0
libtpu: 0.0.40
codegen_flags: <defaults>
</compile_context>

<pallas_src>
import jax
import jax.numpy as jnp
from jax import lax
from jax.experimental import pallas as pl
from jax.experimental.pallas import tpu as pltpu  # noqa: F401  (kept for CompilerParams use at scale)

# ---- module hyper-parameters (shrunk, see TODOs above) -------------------
WINDOW = 32          # real CLIP._WINDOW_SIZE is 224
EMBED_DIM = 128      # real ViT-B/32 embedding dim is 512
CHOPS = 8            # module default is 64
MACRO = 0.5
USE_TILING = True
CLIP_MEAN = (0.48145466, 0.4578275, 0.40821073)
CLIP_STD = (0.26862954, 0.26130258, 0.27577711)

ROW_PAD = 16         # pad view-rows to a multiple of 16 (full bf16 vreg sublane packing)
P_PAD = 128          # pad prompt columns to a full 128-lane output (unmasked stores)


# ---------------------------------------------------------------------------
# Single fused kernel: image-encode (Normalize folded into weights) ->
# cosine similarity (rsqrt-scaled) vs. the whole padded prompt slab.
# One invocation, no grid: every operand fits comfortably in VMEM.
# ---------------------------------------------------------------------------
def _encode_similarity(x_flat_bf16, w_fold, b_fold, prompt_slab_bf16):
    """x_flat_bf16: (N, F) bf16 flattened unique views (N % 16 == 0)
       w_fold:      (F, D) bf16 encoder projection with CLIP Normalize folded in
       b_fold:      (1, D) f32 folded bias
       prompt_slab_bf16: (D, P_PAD) bf16 L2-normalized prompts [prompts|detail|anti|zeros]
       returns (N, P_PAD) f32 cosine similarities."""
    n, f = x_flat_bf16.shape
    d = w_fold.shape[1]
    p = prompt_slab_bf16.shape[1]
    assert n % 16 == 0 and p % 128 == 0

    def kernel(x_ref, w_ref, b_ref, p_ref, sim_ref):
        # bf16 MXU path, f32 accumulation.
        e = jnp.dot(x_ref[...], w_ref[...], preferred_element_type=jnp.float32)
        e = e + b_ref[...]                                       # (N, D) embeddings
        sumsq = jnp.sum(e * e, axis=-1, keepdims=True)           # (N, 1)
        inv_norm = lax.rsqrt(jnp.maximum(sumsq, 1e-16))          # EUP, cosine eps
        s = jnp.dot(e.astype(jnp.bfloat16), p_ref[...],
                    preferred_element_type=jnp.float32)          # (N, P_PAD)
        sim_ref[...] = s * inv_norm                              # scale result, not embeddings

    return pl.pallas_call(
        kernel,
        out_shape=jax.ShapeDtypeStruct((n, p), jnp.float32),
        in_specs=[
            pl.BlockSpec((n, f), lambda: (0, 0)),    # view rows (bf16, whole slab)
            pl.BlockSpec((f, d), lambda: (0, 0)),    # encoder weights (bf16, DMA'd once)
            pl.BlockSpec((1, d), lambda: (0, 0)),    # folded bias
            pl.BlockSpec((d, p), lambda: (0, 0)),    # padded prompt slab (bf16)
        ],
        out_specs=pl.BlockSpec((n, p), lambda: (0, 0)),
    )(x_flat_bf16, w_fold, b_fold, prompt_slab_bf16)


# ---------------------------------------------------------------------------
# Parameter setup: synthetic encoder + prompts, Normalize folded into weights.
# ---------------------------------------------------------------------------
def init_params(key, channels=3):
    feat = channels * WINDOW * WINDOW
    k1, k2, k3, k4, k5 = jax.random.split(key, 5)
    w = (jax.random.normal(k1, (feat, EMBED_DIM), jnp.float32)
         * (1.0 / jnp.sqrt(jnp.float32(feat))))
    b = jax.random.normal(k2, (1, EMBED_DIM), jnp.float32) * 0.01

    # Fold CLIP Normalize(mean, std) into the projection:
    #   ((x - mean) / std) @ W + b == x @ (W / std[:,None]) + (b - (mean/std) @ W)
    mean_f = jnp.repeat(jnp.asarray(CLIP_MEAN, jnp.float32), WINDOW * WINDOW)
    inv_std_f = 1.0 / jnp.repeat(jnp.asarray(CLIP_STD, jnp.float32), WINDOW * WINDOW)
    w_fold = (w * inv_std_f[:, None]).astype(jnp.bfloat16)
    # Compute the folded bias from the bf16-cast weights the kernel actually uses.
    b_fold = b - (mean_f * inv_std_f)[None, :] @ w_fold.astype(jnp.float32)

    def text_emb(k, n):                                          # pre-normalized prompt embeddings
        e = jax.random.normal(k, (n, EMBED_DIM), jnp.float32)
        e = e / jnp.maximum(jnp.linalg.norm(e, axis=-1, keepdims=True), 1e-8)
        return e.T                                               # (D, n)

    return dict(
        w_fold=w_fold, b_fold=b_fold,
        prompts_t=text_emb(k3, 2),       # two prompts
        detail_t=text_emb(k4, 2),        # two detail prompts
        anti_t=text_emb(k5, 1),          # one anti-prompt
    )


# ---------------------------------------------------------------------------
# Forward pass (mirrors CLIP.forward): one similarity per batch element.
# ---------------------------------------------------------------------------
def clip_forward(img, params):
    b, c, h, w = img.shape
    n_micro = CHOPS // 2

    # --- unique views (deterministic stand-ins for the random augmentations) ---
    # macro: all (CHOPS - CHOPS//2) RandomResizedCrop views collapse to one resized image.
    macro = jax.image.resize(img, (b, c, WINDOW, WINDOW), method="bilinear")
    # micro: n_micro identical center crops (weight n_micro) + 4 corner tiles (weight 1 each).
    top, left = (h - WINDOW) // 2, (w - WINDOW) // 2
    micro_views = [img[:, :, top:top + WINDOW, left:left + WINDOW]]
    micro_weights = [float(n_micro)]
    if USE_TILING:
        for t in (0, h - WINDOW):
            for l in (0, w - WINDOW):
                micro_views.append(img[:, :, t:t + WINDOW, l:l + WINDOW])
                micro_weights.append(1.0)
    micro = jnp.stack(micro_views, axis=1)                     # (b, n_mic, c, W, W)
    n_mic = micro.shape[1]

    views = jnp.concatenate([macro[:, None], micro], axis=1)   # (b, 1 + n_mic, c, W, W)
    t_total = 1 + n_mic
    # Cast to bf16 in the wrapper: halves activation DMA, MXU consumes bf16 anyway.
    x_flat = views.reshape(b * t_total, -1).astype(jnp.bfloat16)

    n_rows = x_flat.shape[0]
    n_pad = ((n_rows + ROW_PAD - 1) // ROW_PAD) * ROW_PAD      # pad rows to bf16 packing multiple
    if n_pad != n_rows:
        x_flat = jnp.pad(x_flat, ((0, n_pad - n_rows), (0, 0)))

    # --- one fused prompt slab: [prompts | detail | anti | zero-padding] ----
    ratio = min(WINDOW / h, WINDOW / w)                        # static python branch
    detail_t = params["detail_t"] if ratio < 0.5 else params["prompts_t"]
    n_p = params["prompts_t"].shape[1]
    n_d = detail_t.shape[1]
    slab = jnp.concatenate([params["prompts_t"], detail_t, params["anti_t"]], axis=1)
    p_real = slab.shape[1]
    slab = jnp.pad(slab, ((0, 0), (0, P_PAD - p_real))).astype(jnp.bfloat16)   # lane-dense output

    # --- single Pallas kernel launch ---------------------------------------
    sim = _encode_similarity(x_flat, params["w_fold"], params["b_fold"], slab)
    sim = sim[:n_rows, :p_real].reshape(b, t_total, p_real)    # (b, T, P)

    # --- tiny per-group reductions in plain JAX -----------------------------
    # macro, match="all": chunk mean over (identical) views x prompts == mean over prompts.
    prompt_similarity = jnp.mean(sim[:, 0, :n_p], axis=-1)                       # (b,)
    # micro, match="any": per-view max over detail prompts, weighted mean over views
    # (center crop carries weight n_micro, each tile weight 1 -> same as original chunk mean).
    wts = jnp.asarray(micro_weights, jnp.float32)
    wts = wts / jnp.sum(wts)
    detail_similarity = jnp.sum(
        jnp.max(sim[:, 1:, n_p:n_p + n_d], axis=-1) * wts[None, :], axis=-1)     # (b,)
    # anti, match="any": single anti-prompt -> max is identity.
    anti_similarity = 1.0 - jnp.sum(sim[:, 1:, n_p + n_d] * wts[None, :], axis=-1)

    macro_boost = max(h, w) ** 2 / WINDOW ** 2
    macro_w = MACRO * macro_boost / (1.0 + macro_boost)
    similarity = macro_w * prompt_similarity + (1.0 - macro_w) * detail_similarity
    return similarity * anti_similarity                                          # (b,)


if __name__ == "__main__":
    key = jax.random.PRNGKey(0)
    k_img, k_par = jax.random.split(key)
    img = jax.random.uniform(k_img, (2, 3, 48, 48), jnp.float32)   # NCHW, values in [0, 1)
    params = init_params(k_par)

    out = jax.jit(clip_forward)(img, params)
    out = jax.block_until_ready(out)

    assert out.shape == (2,), out.shape
    assert bool(jnp.all(jnp.isfinite(out)))
    print("KERNEL_OK")
</pallas_src>

<mosaic_0001>
module attributes {stable_mosaic.version = 11 : i64} {
  func.func @kernel(%arg0: memref<16x3072xbf16, #tpu.memory_space<vmem>>, %arg1: memref<3072x128xbf16, #tpu.memory_space<vmem>>, %arg2: memref<1x128xf32, #tpu.memory_space<vmem>>, %arg3: memref<128x128xbf16, #tpu.memory_space<vmem>>, %arg4: memref<16x128xf32, #tpu.memory_space<vmem>>) attributes {dimension_semantics = [], scalar_prefetch = 0 : i64, scratch_operands = 0 : i64, tpu.core_type = #tpu.core_type<tc>} {
    %c0 = arith.constant 0 : index
    %c0_0 = arith.constant 0 : index
    %0 = vector.load %arg0[%c0, %c0_0] : memref<16x3072xbf16, #tpu.memory_space<vmem>>, vector<16x3072xbf16>
    %c0_1 = arith.constant 0 : index
    %c0_2 = arith.constant 0 : index
    %1 = vector.load %arg1[%c0_1, %c0_2] : memref<3072x128xbf16, #tpu.memory_space<vmem>>, vector<3072x128xbf16>
    %cst = arith.constant dense<0.000000e+00> : vector<16x128xf32>
    %2 = tpu.matmul %0, %1, %cst {dimension_numbers = #tpu.dot_dimension_numbers<[1], [0], [0], [1], [0, 0, 1, 1], [], []>} : vector<16x3072xbf16>, vector<3072x128xbf16>, vector<16x128xf32> -> vector<16x128xf32>
    %c0_3 = arith.constant 0 : index
    %c0_4 = arith.constant 0 : index
    %3 = vector.load %arg2[%c0_3, %c0_4] : memref<1x128xf32, #tpu.memory_space<vmem>>, vector<1x128xf32>
    %4 = vector.broadcast %3 : vector<1x128xf32> to vector<16x128xf32>
    %5 = arith.addf %2, %4 : vector<16x128xf32>
    %6 = arith.mulf %5, %5 : vector<16x128xf32>
    %cst_5 = arith.constant dense<0.000000e+00> : vector<16xf32>
    %7 = vector.multi_reduction <add>, %6, %cst_5 [1] : vector<16x128xf32> to vector<16xf32>
    %8 = vector.shape_cast %7 : vector<16xf32> to vector<16x1xf32>
    %cst_6 = arith.constant 1.000000e-16 : f32
    %9 = vector.broadcast %cst_6 : f32 to vector<16x1xf32>
    %10 = arith.maximumf %8, %9 : vector<16x1xf32>
    %11 = math.rsqrt %10 : vector<16x1xf32>
    %12 = arith.truncf %5 : vector<16x128xf32> to vector<16x128xbf16>
    %c0_7 = arith.constant 0 : index
    %c0_8 = arith.constant 0 : index
    %13 = vector.load %arg3[%c0_7, %c0_8] : memref<128x128xbf16, #tpu.memory_space<vmem>>, vector<128x128xbf16>
    %cst_9 = arith.constant dense<0.000000e+00> : vector<16x128xf32>
    %14 = tpu.matmul %12, %13, %cst_9 {dimension_numbers = #tpu.dot_dimension_numbers<[1], [0], [0], [1], [0, 0, 1, 1], [], []>} : vector<16x128xbf16>, vector<128x128xbf16>, vector<16x128xf32> -> vector<16x128xf32>
    %15 = vector.broadcast %11 : vector<16x1xf32> to vector<16x128xf32>
    %16 = arith.mulf %14, %15 : vector<16x128xf32>
    %c0_10 = arith.constant 0 : index
    %c0_11 = arith.constant 0 : index
    %17 = vector.load %arg4[%c0_10, %c0_11] : memref<16x128xf32, #tpu.memory_space<vmem>>, vector<16x128xf32>
    tpu.vector_store %arg4[%c0_10, %c0_11], %16 {strides = array<i32>} : memref<16x128xf32, #tpu.memory_space<vmem>>, vector<16x128xf32>,
    return
  }
}

</mosaic_0001>

<llo_original>
// kernel: clip_forward.1
$region0: #{clip_forward.1}
  #allocation0 [shape = 'u32[]', space=smem, size = 0x4, offset = 0x4, fixed_abs, tag = 'smem constant byte address 0x4 - core index']
  #allocation1 [shape = 'u32[72,128]{1,0:T(1,128)}', space=vmem, size = 0x9000, scoped, tag = 'internal scratch']
  %s0 = inlined_call_operand.vmem [shape: bf16[16,3072], index: 0, kind: input, shape index: {}]
  %s1 = inlined_call_operand.vmem [shape: bf16[3072,128], index: 1, kind: input, shape index: {}]
  %s2 = inlined_call_operand.vmem [shape: f32[1,128], index: 2, kind: input, shape index: {}]
  %s3 = inlined_call_operand.vmem [shape: bf16[128,128], index: 3, kind: input, shape index: {}]
  %s4 = inlined_call_operand.vmem [shape: f32[16,128], index: 4, kind: output, shape index: {}]
  %s5 = sld [smem:[#allocation0]]
  $region26: #{clip_forward.1} parent=0
    _
  %s7 = ssub.s32 1, %s5
  %s8 = scalar_select 0, %s7, %s5
  // Predicated region
  $region2: #{clip_forward.1} parent=0 // pred_check
    _
  $region3: #{clip_forward.1} parent=0 // pred_check_branch
    %10 = sbr.rel (0) target = $region5
  $region4: #{clip_forward.1} parent=0 // pred_region
    _
  $region5: #{clip_forward.1} parent=0 // pred_fallthru
    _
  // Predicated region
  $region6: #{clip_forward.1} parent=0 // pred_check
    _
  $region7: #{clip_forward.1} parent=0 // pred_check_branch
    %12 = sbr.rel (0) target = $region9
  $region8: #{clip_forward.1} parent=0 // pred_region
    _
  $region9: #{clip_forward.1} parent=0 // pred_fallthru
    _
  // Predicated region
  $region10: #{clip_forward.1} parent=0 // pred_check
    _
  $region11: #{clip_forward.1} parent=0 // pred_check_branch
    %14 = sbr.rel (0) target = $region13
  $region12: #{clip_forward.1} parent=0 // pred_region
    _
  $region13: #{clip_forward.1} parent=0 // pred_fallthru
    _
  // Predicated region
  $region14: #{clip_forward.1} parent=0 // pred_check
    _
  $region15: #{clip_forward.1} parent=0 // pred_check_branch
    %16 = sbr.rel (0) target = $region17
  $region16: #{clip_forward.1} parent=0 // pred_region
    _
  $region17: #{clip_forward.1} parent=0 // pred_fallthru
    _
  %v17 = vld [vmem:[%s0] sm:$0xff]
  %v18 = vld [vmem:[%s0 + $0x8] sm:$0xff]
  %v19 = vld [vmem:[%s0 + $0x10] sm:$0xff]
  %v20 = vld [vmem:[%s0 + $0x18] sm:$0xff]
  %v21 = vld [vmem:[%s0 + $0x20] sm:$0xff]
  %v22 = vld [vmem:[%s0 + $0x28] sm:$0xff]
  %v23 = vld [vmem:[%s0 + $0x30] sm:$0xff]
  %v24 = vld [vmem:[%s0 + $0x38] sm:$0xff]
  %v25 = vld [vmem:[%s0 + $0x40] sm:$0xff]
  %v26 = vld [vmem:[%s0 + $0x48] sm:$0xff]
  %v27 = vld [vmem:[%s0 + $0x50] sm:$0xff]
  %v28 = vld [vmem:[%s0 + $0x58] sm:$0xff]
  %v29 = vld [vmem:[%s0 + $0x60] sm:$0xff]
  %v30 = vld [vmem:[%s0 + $0x68] sm:$0xff]
  %v31 = vld [vmem:[%s0 + $0x70] sm:$0xff]
  %v32 = vld [vmem:[%s0 + $0x78] sm:$0xff]
  %v33 = vld [vmem:[%s0 + $0x80] sm:$0xff]
  %v34 = vld [vmem:[%s0 + $0x88] sm:$0xff]
  %v35 = vld [vmem:[%s0 + $0x90] sm:$0xff]
  %v36 = vld [vmem:[%s0 + $0x98] sm:$0xff]
  %v37 = vld [vmem:[%s0 + $0xa0] sm:$0xff]
  %v38 = vld [vmem:[%s0 + $0xa8] sm:$0xff]
  %v39 = vld [vmem:[%s0 + $0xb0] sm:$0xff]
  %v40 = vld [vmem:[%s0 + $0xb8] sm:$0xff]
  %v41 = vld [vmem:[%s1] sm:$0xf]
  %v42 = vld [vmem:[%s1 + $0x4] sm:$0xf]
  %v43 = vld [vmem:[%s1 + $0x8] sm:$0xf]
  %v44 = vld [vmem:[%s1 + $0xc] sm:$0xf]
  %v45 = vld [vmem:[%s1 + $0x10] sm:$0xf]
  %v46 = vld [vmem:[%s1 + $0x14] sm:$0xf]
  %v47 = vld [vmem:[%s1 + $0x18] sm:$0xf]
  %v48 = vld [vmem:[%s1 + $0x1c] sm:$0xf]
  %v49 = vld [vmem:[%s1 + $0x20] sm:$0xf]
  %v50 = vld [vmem:[%s1 + $0x24] sm:$0xf]
  %v51 = vld [vmem:[%s1 + $0x28] sm:$0xf]
  %v52 = vld [vmem:[%s1 + $0x2c] sm:$0xf]
  %v53 = vld [vmem:[%s1 + $0x30] sm:$0xf]
  %v54 = vld [vmem:[%s1 + $0x34] sm:$0xf]
  %v55 = vld [vmem:[%s1 + $0x38] sm:$0xf]
  %v56 = vld [vmem:[%s1 + $0x3c] sm:$0xf]
  %v57 = vld [vmem:[%s1 + $0x40] sm:$0xf]
  %v58 = vld [vmem:[%s1 + $0x44] sm:$0xf]
  %v59 = vld [vmem:[%s1 + $0x48] sm:$0xf]
  %v60 = vld [vmem:[%s1 + $0x4c] sm:$0xf]
  %v61 = vld [vmem:[%s1 + $0x50] sm:$0xf]
  %v62 = vld [vmem:[%s1 + $0x54] sm:$0xf]
  %v63 = vld [vmem:[%s1 + $0x58] sm:$0xf]
  %v64 = vld [vmem:[%s1 + $0x5c] sm:$0xf]
  %v65 = vld [vmem:[%s1 + $0x60] sm:$0xf]
  %v66 = vld [vmem:[%s1 + $0x64] sm:$0xf]
  %v67 = vld [vmem:[%s1 + $0x68] sm:$0xf]
  %v68 = vld [vmem:[%s1 + $0x6c] sm:$0xf]
  %v69 = vld [vmem:[%s1 + $0x70] sm:$0xf]
  %v70 = vld [vmem:[%s1 + $0x74] sm:$0xf]
  %v71 = vld [vmem:[%s1 + $0x78] sm:$0xf]
  %v72 = vld [vmem:[%s1 + $0x7c] sm:$0xf]
  %v73 = vld [vmem:[%s1 + $0x80] sm:$0xf]
  %v74 = vld [vmem:[%s1 + $0x84] sm:$0xf]
  %v75 = vld [vmem:[%s1 + $0x88] sm:$0xf]
  %v76 = vld [vmem:[%s1 + $0x8c] sm:$0xf]
  %v77 = vld [vmem:[%s1 + $0x90] sm:$0xf]
  %v78 = vld [vmem:[%s1 + $0x94] sm:$0xf]
  %v79 = vld [vmem:[%s1 + $0x98] sm:$0xf]
  %v80 = vld [vmem:[%s1 + $0x9c] sm:$0xf]
  %v81 = vld [vmem:[%s1 + $0xa0] sm:$0xf]
  %v82 = vld [vmem:[%s1 + $0xa4] sm:$0xf]
  %v83 = vld [vmem:[%s1 + $0xa8] sm:$0xf]
  %v84 = vld [vmem:[%s1 + $0xac] sm:$0xf]
  %v85 = vld [vmem:[%s1 + $0xb0] sm:$0xf]
  %v86 = vld [vmem:[%s1 + $0xb4] sm:$0xf]
  %v87 = vld [vmem:[%s1 + $0xb8] sm:$0xf]
  %v88 = vld [vmem:[%s1 + $0xbc] sm:$0xf]
  %v89 = vld [vmem:[%s1 + $0xc0] sm:$0xf]
  %v90 = vld [vmem:[%s1 + $0xc4] sm:$0xf]
  %v91 = vld [vmem:[%s1 + $0xc8] sm:$0xf]
  %v92 = vld [vmem:[%s1 + $0xcc] sm:$0xf]
  %v93 = vld [vmem:[%s1 + $0xd0] sm:$0xf]
  %v94 = vld [vmem:[%s1 + $0xd4] sm:$0xf]
  %v95 = vld [vmem:[%s1 + $0xd8] sm:$0xf]
  %v96 = vld [vmem:[%s1 + $0xdc] sm:$0xf]
  %v97 = vld [vmem:[%s1 + $0xe0] sm:$0xf]
  %v98 = vld [vmem:[%s1 + $0xe4] sm:$0xf]
  %v99 = vld [vmem:[%s1 + $0xe8] sm:$0xf]
  %v100 = vld [vmem:[%s1 + $0xec] sm:$0xf]
  %v101 = vld [vmem:[%s1 + $0xf0] sm:$0xf]
  %v102 = vld [vmem:[%s1 + $0xf4] sm:$0xf]
  %v103 = vld [vmem:[%s1 + $0xf8] sm:$0xf]
  %v104 = vld [vmem:[%s1 + $0xfc] sm:$0xf]
  %v105 = vld [vmem:[%s1 + $0x100] sm:$0xf]
  %v106 = vld [vmem:[%s1 + $0x104] sm:$0xf]
  %v107 = vld [vmem:[%s1 + $0x108] sm:$0xf]
  %v108 = vld [vmem:[%s1 + $0x10c] sm:$0xf]
  %v109 = vld [vmem:[%s1 + $0x110] sm:$0xf]
  %v110 = vld [vmem:[%s1 + $0x114] sm:$0xf]
  %v111 = vld [vmem:[%s1 + $0x118] sm:$0xf]
  %v112 = vld [vmem:[%s1 + $0x11c] sm:$0xf]
  %v113 = vld [vmem:[%s1 + $0x120] sm:$0xf]
  %v114 = vld [vmem:[%s1 + $0x124] sm:$0xf]
  %v115 = vld [vmem:[%s1 + $0x128] sm:$0xf]
  %v116 = vld [vmem:[%s1 + $0x12c] sm:$0xf]
  %v117 = vld [vmem:[%s1 + $0x130] sm:$0xf]
  %v118 = vld [vmem:[%s1 + $0x134] sm:$0xf]
  %v119 = vld [vmem:[%s1 + $0x138] sm:$0xf]
  %v120 = vld [vmem:[%s1 + $0x13c] sm:$0xf]
  %v121 = vld [vmem:[%s1 + $0x140] sm:$0xf]
  %v122 = vld [vmem:[%s1 + $0x144] sm:$0xf]
  %v123 = vld [vmem:[%s1 + $0x148] sm:$0xf]
  %v124 = vld [vmem:[%s1 + $0x14c] sm:$0xf]
  %v125 = vld [vmem:[%s1 + $0x150] sm:$0xf]
  %v126 = vld [vmem:[%s1 + $0x154] sm:$0xf]
  %v127 = vld [vmem:[%s1 + $0x158] sm:$0xf]
  %v128 = vld [vmem:[%s1 + $0x15c] sm:$0xf]
  %v129 = vld [vmem:[%s1 + $0x160] sm:$0xf]
  %v130 = vld [vmem:[%s1 + $0x164] sm:$0xf]
  %v131 = vld [vmem:[%s1 + $0x168] sm:$0xf]
  %v132 = vld [vmem:[%s1 + $0x16c] sm:$0xf]
  %v133 = vld [vmem:[%s1 + $0x170] sm:$0xf]
  %v134 = vld [vmem:[%s1 + $0x174] sm:$0xf]
  %v135 = vld [vmem:[%s1 + $0x178] sm:$0xf]
  %v136 = vld [vmem:[%s1 + $0x17c] sm:$0xf]
  %v137 = vld [vmem:[%s1 + $0x180] sm:$0xf]
  %v138 = vld [vmem:[%s1 + $0x184] sm:$0xf]
  %v139 = vld [vmem:[%s1 + $0x188] sm:$0xf]
  %v140 = vld [vmem:[%s1 + $0x18c] sm:$0xf]
  %v141 = vld [vmem:[%s1 + $0x190] sm:$0xf]
  %v142 = vld [vmem:[%s1 + $0x194] sm:$0xf]
  %v143 = vld [vmem:[%s1 + $0x198] sm:$0xf]
  %v144 = vld [vmem:[%s1 + $0x19c] sm:$0xf]
  %v145 = vld [vmem:[%s1 + $0x1a0] sm:$0xf]
  %v146 = vld [vmem:[%s1 + $0x1a4] sm:$0xf]
  %v147 = vld [vmem:[%s1 + $0x1a8] sm:$0xf]
  %v148 = vld [vmem:[%s1 + $0x1ac] sm:$0xf]
  %v149 = vld [vmem:[%s1 + $0x1b0] sm:$0xf]
  %v150 = vld [vmem:[%s1 + $0x1b4] sm:$0xf]
  %v151 = vld [vmem:[%s1 + $0x1b8] sm:$0xf]
  %v152 = vld [vmem:[%s1 + $0x1bc] sm:$0xf]
  %v153 = vld [vmem:[%s1 + $0x1c0] sm:$0xf]
  %v154 = vld [vmem:[%s1 + $0x1c4] sm:$0xf]
  %v155 = vld [vmem:[%s1 + $0x1c8] sm:$0xf]
  %v156 = vld [vmem:[%s1 + $0x1cc] sm:$0xf]
  %v157 = vld [vmem:[%s1 + $0x1d0] sm:$0xf]
  %v158 = vld [vmem:[%s1 + $0x1d4] sm:$0xf]
  %v159 = vld [vmem:[%s1 + $0x1d8] sm:$0xf]
  %v160 = vld [vmem:[%s1 + $0x1dc] sm:$0xf]
  %v161 = vld [vmem:[%s1 + $0x1e0] sm:$0xf]
  %v162 = vld [vmem:[%s1 + $0x1e4] sm:$0xf]
  %v163 = vld [vmem:[%s1 + $0x1e8] sm:$0xf]
  %v164 = vld [vmem:[%s1 + $0x1ec] sm:$0xf]
  %v165 = vld [vmem:[%s1 + $0x1f0] sm:$0xf]
  %v166 = vld [vmem:[%s1 + $0x1f4] sm:$0xf]
  %v167 = vld [vmem:[%s1 + $0x1f8] sm:$0xf]
  %v168 = vld [vmem:[%s1 + $0x1fc] sm:$0xf]
  %v169 = vld [vmem:[%s1 + $0x200] sm:$0xf]
  %v170 = vld [vmem:[%s1 + $0x204] sm:$0xf]
  %v171 = vld [vmem:[%s1 + $0x208] sm:$0xf]
  %v172 = vld [vmem:[%s1 + $0x20c] sm:$0xf]
  %v173 = vld [vmem:[%s1 + $0x210] sm:$0xf]
  %v174 = vld [vmem:[%s1 + $0x214] sm:$0xf]
  %v175 = vld [vmem:[%s1 + $0x218] sm:$0xf]
  %v176 = vld [vmem:[%s1 + $0x21c] sm:$0xf]
  %v177 = vld [vmem:[%s1 + $0x220] sm:$0xf]
  %v178 = vld [vmem:[%s1 + $0x224] sm:$0xf]
  %v179 = vld [vmem:[%s1 + $0x228] sm:$0xf]
  %v180 = vld [vmem:[%s1 + $0x22c] sm:$0xf]
  %v181 = vld [vmem:[%s1 + $0x230] sm:$0xf]
  %v182 = vld [vmem:[%s1 + $0x234] sm:$0xf]
  %v183 = vld [vmem:[%s1 + $0x238] sm:$0xf]
  %v184 = vld [vmem:[%s1 + $0x23c] sm:$0xf]
  %v185 = vld [vmem:[%s1 + $0x240] sm:$0xf]
  %v186 = vld [vmem:[%s1 + $0x244] sm:$0xf]
  %v187 = vld [vmem:[%s1 + $0x248] sm:$0xf]
  %v188 = vld [vmem:[%s1 + $0x24c] sm:$0xf]
  %v189 = vld [vmem:[%s1 + $0x250] sm:$0xf]
  %v190 = vld [vmem:[%s1 + $0x254] sm:$0xf]
  %v191 = vld [vmem:[%s1 + $0x258] sm:$0xf]
  %v192 = vld [vmem:[%s1 + $0x25c] sm:$0xf]
  %v193 = vld [vmem:[%s1 + $0x260] sm:$0xf]
  %v194 = vld [vmem:[%s1 + $0x264] sm:$0xf]
  %v195 = vld [vmem:[%s1 + $0x268] sm:$0xf]
  %v196 = vld [vmem:[%s1 + $0x26c] sm:$0xf]
  %v197 = vld [vmem:[%s1 + $0x270] sm:$0xf]
  %v198 = vld [vmem:[%s1 + $0x274] sm:$0xf]
  %v199 = vld [vmem:[%s1 + $0x278] sm:$0xf]
  %v200 = vld [vmem:[%s1 + $0x27c] sm:$0xf]
  %v201 = vld [vmem:[%s1 + $0x280] sm:$0xf]
  %v202 = vld [vmem:[%s1 + $0x284] sm:$0xf]
  %v203 = vld [vmem:[%s1 + $0x288] sm:$0xf]
  %v204 = vld [vmem:[%s1 + $0x28c] sm:$0xf]
  %v205 = vld [vmem:[%s1 + $0x290] sm:$0xf]
  %v206 = vld [vmem:[%s1 + $0x294] sm:$0xf]
  %v207 = vld [vmem:[%s1 + $0x298] sm:$0xf]
  %v208 = vld [vmem:[%s1 + $0x29c] sm:$0xf]
  %v209 = vld [vmem:[%s1 + $0x2a0] sm:$0xf]
  %v210 = vld [vmem:[%s1 + $0x2a4] sm:$0xf]
  %v211 = vld [vmem:[%s1 + $0x2a8] sm:$0xf]
  %v212 = vld [vmem:[%s1 + $0x2ac] sm:$0xf]
  %v213 = vld [vmem:[%s1 + $0x2b0] sm:$0xf]
  %v214 = vld [vmem:[%s1 + $0x2b4] sm:$0xf]
  %v215 = vld [vmem:[%s1 + $0x2b8] sm:$0xf]
  %v216 = vld [vmem:[%s1 + $0x2bc] sm:$0xf]
  %v217 = vld [vmem:[%s1 + $0x2c0] sm:$0xf]
  %v218 = vld [vmem:[%s1 + $0x2c4] sm:$0xf]
  %v219 = vld [vmem:[%s1 + $0x2c8] sm:$0xf]
  %v220 = vld [vmem:[%s1 + $0x2cc] sm:$0xf]
  %v221 = vld [vmem:[%s1 + $0x2d0] sm:$0xf]
  %v222 = vld [vmem:[%s1 + $0x2d4] sm:$0xf]
  %v223 = vld [vmem:[%s1 + $0x2d8] sm:$0xf]
  %v224 = vld [vmem:[%s1 + $0x2dc] sm:$0xf]
  %v225 = vld [vmem:[%s1 + $0x2e0] sm:$0xf]
  %v226 = vld [vmem:[%s1 + $0x2e4] sm:$0xf]
  %v227 = vld [vmem:[%s1 + $0x2e8] sm:$0xf]
  %v228 = vld [vmem:[%s1 + $0x2ec] sm:$0xf]
  %v229 = vld [vmem:[%s1 + $0x2f0] sm:$0xf]
  %v230 = vld [vmem:[%s1 + $0x2f4] sm:$0xf]
  %v231 = vld [vmem:[%s1 + $0x2f8] sm:$0xf]
  %v232 = vld [vmem:[%s1 + $0x2fc] sm:$0xf]
  %v233 = vld [vmem:[%s1 + $0x300] sm:$0xf]
  %v234 = vld [vmem:[%s1 + $0x304] sm:$0xf]
  %v235 = vld [vmem:[%s1 + $0x308] sm:$0xf]
  %v236 = vld [vmem:[%s1 + $0x30c] sm:$0xf]
  %v237 = vld [vmem:[%s1 + $0x310] sm:$0xf]
  %v238 = vld [vmem:[%s1 + $0x314] sm:$0xf]
  %v239 = vld [vmem:[%s1 + $0x318] sm:$0xf]
  %v240 = vld [vmem:[%s1 + $0x31c] sm:$0xf]
  %v241 = vld [vmem:[%s1 + $0x320] sm:$0xf]
  %v242 = vld [vmem:[%s1 + $0x324] sm:$0xf]
  %v243 = vld [vmem:[%s1 + $0x328] sm:$0xf]
  %v244 = vld [vmem:[%s1 + $0x32c] sm:$0xf]
  %v245 = vld [vmem:[%s1 + $0x330] sm:$0xf]
  %v246 = vld [vmem:[%s1 + $0x334] sm:$0xf]
  %v247 = vld [vmem:[%s1 + $0x338] sm:$0xf]
  %v248 = vld [vmem:[%s1 + $0x33c] sm:$0xf]
  %v249 = vld [vmem:[%s1 + $0x340] sm:$0xf]
  %v250 = vld [vmem:[%s1 + $0x344] sm:$0xf]
  %v251 = vld [vmem:[%s1 + $0x348] sm:$0xf]
  %v252 = vld [vmem:[%s1 + $0x34c] sm:$0xf]
  %v253 = vld [vmem:[%s1 + $0x350] sm:$0xf]
  %v254 = vld [vmem:[%s1 + $0x354] sm:$0xf]
  %v255 = vld [vmem:[%s1 + $0x358] sm:$0xf]
  %v256 = vld [vmem:[%s1 + $0x35c] sm:$0xf]
  %v257 = vld [vmem:[%s1 + $0x360] sm:$0xf]
  %v258 = vld [vmem:[%s1 + $0x364] sm:$0xf]
  %v259 = vld [vmem:[%s1 + $0x368] sm:$0xf]
  %v260 = vld [vmem:[%s1 + $0x36c] sm:$0xf]
  %v261 = vld [vmem:[%s1 + $0x370] sm:$0xf]
  %v262 = vld [vmem:[%s1 + $0x374] sm:$0xf]
  %v263 = vld [vmem:[%s1 + $0x378] sm:$0xf]
  %v264 = vld [vmem:[%s1 + $0x37c] sm:$0xf]
  %v265 = vld [vmem:[%s1 + $0x380] sm:$0xf]
  %v266 = vld [vmem:[%s1 + $0x384] sm:$0xf]
  %v267 = vld [vmem:[%s1 + $0x388] sm:$0xf]
  %v268 = vld [vmem:[%s1 + $0x38c] sm:$0xf]
  %v269 = vld [vmem:[%s1 + $0x390] sm:$0xf]
  %v270 = vld [vmem:[%s1 + $0x394] sm:$0xf]
  %v271 = vld [vmem:[%s1 + $0x398] sm:$0xf]
  %v272 = vld [vmem:[%s1 + $0x39c] sm:$0xf]
  %v273 = vld [vmem:[%s1 + $0x3a0] sm:$0xf]
  %v274 = vld [vmem:[%s1 + $0x3a4] sm:$0xf]
  %v275 = vld [vmem:[%s1 + $0x3a8] sm:$0xf]
  %v276 = vld [vmem:[%s1 + $0x3ac] sm:$0xf]
  %v277 = vld [vmem:[%s1 + $0x3b0] sm:$0xf]
  %v278 = vld [vmem:[%s1 + $0x3b4] sm:$0xf]
  %v279 = vld [vmem:[%s1 + $0x3b8] sm:$0xf]
  %v280 = vld [vmem:[%s1 + $0x3bc] sm:$0xf]
  %v281 = vld [vmem:[%s1 + $0x3c0] sm:$0xf]
  %v282 = vld [vmem:[%s1 + $0x3c4] sm:$0xf]
  %v283 = vld [vmem:[%s1 + $0x3c8] sm:$0xf]
  %v284 = vld [vmem:[%s1 + $0x3cc] sm:$0xf]
  %v285 = vld [vmem:[%s1 + $0x3d0] sm:$0xf]
  %v286 = vld [vmem:[%s1 + $0x3d4] sm:$0xf]
  %v287 = vld [vmem:[%s1 + $0x3d8] sm:$0xf]
  %v288 = vld [vmem:[%s1 + $0x3dc] sm:$0xf]
  %v289 = vld [vmem:[%s1 + $0x3e0] sm:$0xf]
  %v290 = vld [vmem:[%s1 + $0x3e4] sm:$0xf]
  %v291 = vld [vmem:[%s1 + $0x3e8] sm:$0xf]
  %v292 = vld [vmem:[%s1 + $0x3ec] sm:$0xf]
  %v293 = vld [vmem:[%s1 + $0x3f0] sm:$0xf]
  %v294 = vld [vmem:[%s1 + $0x3f4] sm:$0xf]
  %v295 = vld [vmem:[%s1 + $0x3f8] sm:$0xf]
  %v296 = vld [vmem:[%s1 + $0x3fc] sm:$0xf]
  %v297 = vld [vmem:[%s1 + $0x400] sm:$0xf]
  %v298 = vld [vmem:[%s1 + $0x404] sm:$0xf]
  %v299 = vld [vmem:[%s1 + $0x408] sm:$0xf]
  %v300 = vld [vmem:[%s1 + $0x40c] sm:$0xf]
  %v301 = vld [vmem:[%s1 + $0x410] sm:$0xf]
  %v302 = vld [vmem:[%s1 + $0x414] sm:$0xf]
  %v303 = vld [vmem:[%s1 + $0x418] sm:$0xf]
  %v304 = vld [vmem:[%s1 + $0x41c] sm:$0xf]
  %v305 = vld [vmem:[%s1 + $0x420] sm:$0xf]
  %v306 = vld [vmem:[%s1 + $0x424] sm:$0xf]
  %v307 = vld [vmem:[%s1 + $0x428] sm:$0xf]
  %v308 = vld [vmem:[%s1 + $0x42c] sm:$0xf]
  %v309 = vld [vmem:[%s1 + $0x430] sm:$0xf]
  %v310 = vld [vmem:[%s1 + $0x434] sm:$0xf]
  %v311 = vld [vmem:[%s1 + $0x438] sm:$0xf]
  %v312 = vld [vmem:[%s1 + $0x43c] sm:$0xf]
  %v313 = vld [vmem:[%s1 + $0x440] sm:$0xf]
  %v314 = vld [vmem:[%s1 + $0x444] sm:$0xf]
  %v315 = vld [vmem:[%s1 + $0x448] sm:$0xf]
  %v316 = vld [vmem:[%s1 + $0x44c] sm:$0xf]
  %v317 = vld [vmem:[%s1 + $0x450] sm:$0xf]
  %v318 = vld [vmem:[%s1 + $0x454] sm:$0xf]
  %v319 = vld [vmem:[%s1 + $0x458] sm:$0xf]
  %v320 = vld [vmem:[%s1 + $0x45c] sm:$0xf]
  %v321 = vld [vmem:[%s1 + $0x460] sm:$0xf]
  %v322 = vld [vmem:[%s1 + $0x464] sm:$0xf]
  %v323 = vld [vmem:[%s1 + $0x468] sm:$0xf]
  %v324 = vld [vmem:[%s1 + $0x46c] sm:$0xf]
  %v325 = vld [vmem:[%s1 + $0x470] sm:$0xf]
  %v326 = vld [vmem:[%s1 + $0x474] sm:$0xf]
  %v327 = vld [vmem:[%s1 + $0x478] sm:$0xf]
  %v328 = vld [vmem:[%s1 + $0x47c] sm:$0xf]
  %v329 = vld [vmem:[%s1 + $0x480] sm:$0xf]
  %v330 = vld [vmem:[%s1 + $0x484] sm:$0xf]
  %v331 = vld [vmem:[%s1 + $0x488] sm:$0xf]
  %v332 = vld [vmem:[%s1 + $0x48c] sm:$0xf]
  %v333 = vld [vmem:[%s1 + $0x490] sm:$0xf]
  %v334 = vld [vmem:[%s1 + $0x494] sm:$0xf]
  %v335 = vld [vmem:[%s1 + $0x498] sm:$0xf]
  %v336 = vld [vmem:[%s1 + $0x49c] sm:$0xf]
  %v337 = vld [vmem:[%s1 + $0x4a0] sm:$0xf]
  %v338 = vld [vmem:[%s1 + $0x4a4] sm:$0xf]
  %v339 = vld [vmem:[%s1 + $0x4a8] sm:$0xf]
  %v340 = vld [vmem:[%s1 + $0x4ac] sm:$0xf]
  %v341 = vld [vmem:[%s1 + $0x4b0] sm:$0xf]
  %v342 = vld [vmem:[%s1 + $0x4b4] sm:$0xf]
  %v343 = vld [vmem:[%s1 + $0x4b8] sm:$0xf]
  %v344 = vld [vmem:[%s1 + $0x4bc] sm:$0xf]
  %v345 = vld [vmem:[%s1 + $0x4c0] sm:$0xf]
  %v346 = vld [vmem:[%s1 + $0x4c4] sm:$0xf]
  %v347 = vld [vmem:[%s1 + $0x4c8] sm:$0xf]
  %v348 = vld [vmem:[%s1 + $0x4cc] sm:$0xf]
  %v349 = vld [vmem:[%s1 + $0x4d0] sm:$0xf]
  %v350 = vld [vmem:[%s1 + $0x4d4] sm:$0xf]
  %v351 = vld [vmem:[%s1 + $0x4d8] sm:$0xf]
  %v352 = vld [vmem:[%s1 + $0x4dc] sm:$0xf]
  %v353 = vld [vmem:[%s1 + $0x4e0] sm:$0xf]
  %v354 = vld [vmem:[%s1 + $0x4e4] sm:$0xf]
  %v355 = vld [vmem:[%s1 + $0x4e8] sm:$0xf]
  %v356 = vld [vmem:[%s1 + $0x4ec] sm:$0xf]
  %v357 = vld [vmem:[%s1 + $0x4f0] sm:$0xf]
  %v358 = vld [vmem:[%s1 + $0x4f4] sm:$0xf]
  %v359 = vld [vmem:[%s1 + $0x4f8] sm:$0xf]
  %v360 = vld [vmem:[%s1 + $0x4fc] sm:$0xf]
  %v361 = vld [vmem:[%s1 + $0x500] sm:$0xf]
  %v362 = vld [vmem:[%s1 + $0x504] sm:$0xf]
  %v363 = vld [vmem:[%s1 + $0x508] sm:$0xf]
  %v364 = vld [vmem:[%s1 + $0x50c] sm:$0xf]
  %v365 = vld [vmem:[%s1 + $0x510] sm:$0xf]
  %v366 = vld [vmem:[%s1 + $0x514] sm:$0xf]
  %v367 = vld [vmem:[%s1 + $0x518] sm:$0xf]
  %v368 = vld [vmem:[%s1 + $0x51c] sm:$0xf]
  %v369 = vld [vmem:[%s1 + $0x520] sm:$0xf]
  %v370 = vld [vmem:[%s1 + $0x524] sm:$0xf]
  %v371 = vld [vmem:[%s1 + $0x528] sm:$0xf]
  %v372 = vld [vmem:[%s1 + $0x52c] sm:$0xf]
  %v373 = vld [vmem:[%s1 + $0x530] sm:$0xf]
  %v374 = vld [vmem:[%s1 + $0x534] sm:$0xf]
  %v375 = vld [vmem:[%s1 + $0x538] sm:$0xf]
  %v376 = vld [vmem:[%s1 + $0x53c] sm:$0xf]
  %v377 = vld [vmem:[%s1 + $0x540] sm:$0xf]
  %v378 = vld [vmem:[%s1 + $0x544] sm:$0xf]
  %v379 = vld [vmem:[%s1 + $0x548] sm:$0xf]
  %v380 = vld [vmem:[%s1 + $0x54c] sm:$0xf]
  %v381 = vld [vmem:[%s1 + $0x550] sm:$0xf]
  %v382 = vld [vmem:[%s1 + $0x554] sm:$0xf]
  %v383 = vld [vmem:[%s1 + $0x558] sm:$0xf]
  %v384 = vld [vmem:[%s1 + $0x55c] sm:$0xf]
  %v385 = vld [vmem:[%s1 + $0x560] sm:$0xf]
  %v386 = vld [vmem:[%s1 + $0x564] sm:$0xf]
  %v387 = vld [vmem:[%s1 + $0x568] sm:$0xf]
  %v388 = vld [vmem:[%s1 + $0x56c] sm:$0xf]
  %v389 = vld [vmem:[%s1 + $0x570] sm:$0xf]
  %v390 = vld [vmem:[%s1 + $0x574] sm:$0xf]
  %v391 = vld [vmem:[%s1 + $0x578] sm:$0xf]
  %v392 = vld [vmem:[%s1 + $0x57c] sm:$0xf]
  %v393 = vld [vmem:[%s1 + $0x580] sm:$0xf]
  %v394 = vld [vmem:[%s1 + $0x584] sm:$0xf]
  %v395 = vld [vmem:[%s1 + $0x588] sm:$0xf]
  %v396 = vld [vmem:[%s1 + $0x58c] sm:$0xf]
  %v397 = vld [vmem:[%s1 + $0x590] sm:$0xf]
  %v398 = vld [vmem:[%s1 + $0x594] sm:$0xf]
  %v399 = vld [vmem:[%s1 + $0x598] sm:$0xf]
  %v400 = vld [vmem:[%s1 + $0x59c] sm:$0xf]
  %v401 = vld [vmem:[%s1 + $0x5a0] sm:$0xf]
  %v402 = vld [vmem:[%s1 + $0x5a4] sm:$0xf]
  %v403 = vld [vmem:[%s1 + $0x5a8] sm:$0xf]
  %v404 = vld [vmem:[%s1 + $0x5ac] sm:$0xf]
  %v405 = vld [vmem:[%s1 + $0x5b0] sm:$0xf]
  %v406 = vld [vmem:[%s1 + $0x5b4] sm:$0xf]
  %v407 = vld [vmem:[%s1 + $0x5b8] sm:$0xf]
  %v408 = vld [vmem:[%s1 + $0x5bc] sm:$0xf]
  %v409 = vld [vmem:[%s1 + $0x5c0] sm:$0xf]
  %v410 = vld [vmem:[%s1 + $0x5c4] sm:$0xf]
  %v411 = vld [vmem:[%s1 + $0x5c8] sm:$0xf]
  %v412 = vld [vmem:[%s1 + $0x5cc] sm:$0xf]
  %v413 = vld [vmem:[%s1 + $0x5d0] sm:$0xf]
  %v414 = vld [vmem:[%s1 + $0x5d4] sm:$0xf]
  %v415 = vld [vmem:[%s1 + $0x5d8] sm:$0xf]
  %v416 = vld [vmem:[%s1 + $0x5dc] sm:$0xf]
  %v417 = vld [vmem:[%s1 + $0x5e0] sm:$0xf]
  %v418 = vld [vmem:[%s1 + $0x5e4] sm:$0xf]
  %v419 = vld [vmem:[%s1 + $0x5e8] sm:$0xf]
  %v420 = vld [vmem:[%s1 + $0x5ec] sm:$0xf]
  %v421 = vld [vmem:[%s1 + $0x5f0] sm:$0xf]
  %v422 = vld [vmem:[%s1 + $0x5f4] sm:$0xf]
  %v423 = vld [vmem:[%s1 + $0x5f8] sm:$0xf]
  %v424 = vld [vmem:[%s1 + $0x5fc] sm:$0xf]
  %v425 = vld [vmem:[%s2] sm:$0x1]
  %v427 = vperm.slane %v425, 0
  %v453 = vunpack.c.l.b16 %v17
  %v454 = vunpack.c.h.b16 %v17
  %v455 = vunpack.c.l.b16 %v18
  %v456 = vunpack.c.h.b16 %v18
  %v457 = vunpack.c.l.b16 %v19
  %v458 = vunpack.c.h.b16 %v19
  %v459 = vunpack.c.l.b16 %v20
  %v460 = vunpack.c.h.b16 %v20
  %v461 = vunpack.c.l.b16 %v21
  %v462 = vunpack.c.h.b16 %v21
  %v463 = vunpack.c.l.b16 %v22
  %v464 = vunpack.c.h.b16 %v22
  %v465 = vunpack.c.l.b16 %v23
  %v466 = vunpack.c.h.b16 %v23
  %v467 = vunpack.c.l.b16 %v24
  %v468 = vunpack.c.h.b16 %v24
  %v469 = vunpack.c.l.b16 %v25
  %v470 = vunpack.c.h.b16 %v25
  %v471 = vunpack.c.l.b16 %v26
  %v472 = vunpack.c.h.b16 %v26
  %v473 = vunpack.c.l.b16 %v27
  %v474 = vunpack.c.h.b16 %v27
  %v475 = vunpack.c.l.b16 %v28
  %v476 = vunpack.c.h.b16 %v28
  %v477 = vunpack.c.l.b16 %v29
  %v478 = vunpack.c.h.b16 %v29
  %v479 = vunpack.c.l.b16 %v30
  %v480 = vunpack.c.h.b16 %v30
  %v481 = vunpack.c.l.b16 %v31
  %v482 = vunpack.c.h.b16 %v31
  %v483 = vunpack.c.l.b16 %v32
  %v484 = vunpack.c.h.b16 %v32
  %v485 = vunpack.c.l.b16 %v33
  %v486 = vunpack.c.h.b16 %v33
  %v487 = vunpack.c.l.b16 %v34
  %v488 = vunpack.c.h.b16 %v34
  %v489 = vunpack.c.l.b16 %v35
  %v490 = vunpack.c.h.b16 %v35
  %v491 = vunpack.c.l.b16 %v36
  %v492 = vunpack.c.h.b16 %v36
  %v493 = vunpack.c.l.b16 %v37
  %v494 = vunpack.c.h.b16 %v37
  %v495 = vunpack.c.l.b16 %v38
  %v496 = vunpack.c.h.b16 %v38
  %v497 = vunpack.c.l.b16 %v39
  %v498 = vunpack.c.h.b16 %v39
  %v499 = vunpack.c.l.b16 %v40
  %v500 = vunpack.c.h.b16 %v40
  %v501 = vpack.c.b16 %v477, %v453
  %v502 = vpack.c.b16 %v478, %v454
  %v503 = vpack.c.b16 %v479, %v455
  %v504 = vpack.c.b16 %v480, %v456
  %v505 = vpack.c.b16 %v481, %v457
  %v506 = vpack.c.b16 %v482, %v458
  %v507 = vpack.c.b16 %v483, %v459
  %v508 = vpack.c.b16 %v484, %v460
  %v509 = vpack.c.b16 %v485, %v461
  %v510 = vpack.c.b16 %v486, %v462
  %v511 = vpack.c.b16 %v487, %v463
  %v512 = vpack.c.b16 %v488, %v464
  %v513 = vpack.c.b16 %v489, %v465
  %v514 = vpack.c.b16 %v490, %v466
  %v515 = vpack.c.b16 %v491, %v467
  %v516 = vpack.c.b16 %v492, %v468
  %v517 = vpack.c.b16 %v493, %v469
  %v518 = vpack.c.b16 %v494, %v470
  %v519 = vpack.c.b16 %v495, %v471
  %v520 = vpack.c.b16 %v496, %v472
  %v521 = vpack.c.b16 %v497, %v473
  %v522 = vpack.c.b16 %v498, %v474
  %v523 = vpack.c.b16 %v499, %v475
  %v524 = vpack.c.b16 %v500, %v476
  %v933 = vunpack.c.l.b16 %v41
  %v934 = vunpack.c.l.b16 %v42
  %v935 = vunpack.c.l.b16 %v43
  %v936 = vunpack.c.l.b16 %v44
  %v937 = vunpack.c.l.b16 %v45
  %v938 = vunpack.c.l.b16 %v46
  %v939 = vunpack.c.l.b16 %v47
  %v940 = vunpack.c.l.b16 %v48
  %v941 = vunpack.c.l.b16 %v49
  %v942 = vunpack.c.l.b16 %v50
  %v943 = vunpack.c.l.b16 %v51
  %v944 = vunpack.c.l.b16 %v52
  %v945 = vunpack.c.l.b16 %v53
  %v946 = vunpack.c.l.b16 %v54
  %v947 = vunpack.c.l.b16 %v55
  %v948 = vunpack.c.l.b16 %v56
  %v949 = vunpack.c.l.b16 %v57
  %v950 = vunpack.c.l.b16 %v58
  %v951 = vunpack.c.l.b16 %v59
  %v952 = vunpack.c.l.b16 %v60
  %v953 = vunpack.c.l.b16 %v61
  %v954 = vunpack.c.l.b16 %v62
  %v955 = vunpack.c.l.b16 %v63
  %v956 = vunpack.c.l.b16 %v64
  %v957 = vunpack.c.l.b16 %v65
  %v958 = vunpack.c.l.b16 %v66
  %v959 = vunpack.c.l.b16 %v67
  %v960 = vunpack.c.l.b16 %v68
  %v961 = vunpack.c.l.b16 %v69
  %v962 = vunpack.c.l.b16 %v70
  %v963 = vunpack.c.l.b16 %v71
  %v964 = vunpack.c.l.b16 %v72
  %v965 = vunpack.c.l.b16 %v73
  %v966 = vunpack.c.l.b16 %v74
  %v967 = vunpack.c.l.b16 %v75
  %v968 = vunpack.c.l.b16 %v76
  %v969 = vunpack.c.l.b16 %v77
  %v970 = vunpack.c.l.b16 %v78
  %v971 = vunpack.c.l.b16 %v79
  %v972 = vunpack.c.l.b16 %v80
  %v973 = vunpack.c.l.b16 %v81
  %v974 = vunpack.c.l.b16 %v82
  %v975 = vunpack.c.l.b16 %v83
  %v976 = vunpack.c.l.b16 %v84
  %v977 = vunpack.c.l.b16 %v85
  %v978 = vunpack.c.l.b16 %v86
  %v979 = vunpack.c.l.b16 %v87
  %v980 = vunpack.c.l.b16 %v88
  %v981 = vunpack.c.l.b16 %v89
  %v982 = vunpack.c.l.b16 %v90
  %v983 = vunpack.c.l.b16 %v91
  %v984 = vunpack.c.l.b16 %v92
  %v985 = vunpack.c.l.b16 %v93
  %v986 = vunpack.c.l.b16 %v94
  %v987 = vunpack.c.l.b16 %v95
  %v988 = vunpack.c.l.b16 %v96
  %v989 = vunpack.c.l.b16 %v97
  %v990 = vunpack.c.l.b16 %v98
  %v991 = vunpack.c.l.b16 %v99
  %v992 = vunpack.c.l.b16 %v100
  %v993 = vunpack.c.l.b16 %v101
  %v994 = vunpack.c.l.b16 %v102
  %v995 = vunpack.c.l.b16 %v103
  %v996 = vunpack.c.l.b16 %v104
  %v997 = vunpack.c.l.b16 %v105
  %v998 = vunpack.c.l.b16 %v106
  %v999 = vunpack.c.l.b16 %v107
  %v1000 = vunpack.c.l.b16 %v108
  %v1001 = vunpack.c.l.b16 %v109
  %v1002 = vunpack.c.l.b16 %v110
  %v1003 = vunpack.c.l.b16 %v111
  %v1004 = vunpack.c.l.b16 %v112
  %v1005 = vunpack.c.l.b16 %v113
  %v1006 = vunpack.c.l.b16 %v114
  %v1007 = vunpack.c.l.b16 %v115
  %v1008 = vunpack.c.l.b16 %v116
  %v1009 = vunpack.c.l.b16 %v117
  %v1010 = vunpack.c.l.b16 %v118
  %v1011 = vunpack.c.l.b16 %v119
  %v1012 = vunpack.c.l.b16 %v120
  %v1013 = vunpack.c.l.b16 %v121
  %v1014 = vunpack.c.l.b16 %v122
  %v1015 = vunpack.c.l.b16 %v123
  %v1016 = vunpack.c.l.b16 %v124
  %v1017 = vunpack.c.l.b16 %v125
  %v1018 = vunpack.c.l.b16 %v126
  %v1019 = vunpack.c.l.b16 %v127
  %v1020 = vunpack.c.l.b16 %v128
  %v1021 = vunpack.c.l.b16 %v129
  %v1022 = vunpack.c.l.b16 %v130
  %v1023 = vunpack.c.l.b16 %v131
  %v1024 = vunpack.c.l.b16 %v132
  %v1025 = vunpack.c.l.b16 %v133
  %v1026 = vunpack.c.l.b16 %v134
  %v1027 = vunpack.c.l.b16 %v135
  %v1028 = vunpack.c.l.b16 %v136
  %v1029 = vunpack.c.l.b16 %v137
  %v1030 = vunpack.c.l.b16 %v138
  %v1031 = vunpack.c.l.b16 %v139
  %v1032 = vunpack.c.l.b16 %v140
  %v1033 = vunpack.c.l.b16 %v141
  %v1034 = vunpack.c.l.b16 %v142
  %v1035 = vunpack.c.l.b16 %v143
  %v1036 = vunpack.c.l.b16 %v144
  %v1037 = vunpack.c.l.b16 %v145
  %v1038 = vunpack.c.l.b16 %v146
  %v1039 = vunpack.c.l.b16 %v147
  %v1040 = vunpack.c.l.b16 %v148
  %v1041 = vunpack.c.l.b16 %v149
  %v1042 = vunpack.c.l.b16 %v150
  %v1043 = vunpack.c.l.b16 %v151
  %v1044 = vunpack.c.l.b16 %v152
  %v1045 = vunpack.c.l.b16 %v153
  %v1046 = vunpack.c.l.b16 %v154
  %v1047 = vunpack.c.l.b16 %v155
  %v1048 = vunpack.c.l.b16 %v156
  %v1049 = vunpack.c.l.b16 %v157
  %v1050 = vunpack.c.l.b16 %v158
  %v1051 = vunpack.c.l.b16 %v159
  %v1052 = vunpack.c.l.b16 %v160
  %v1053 = vunpack.c.l.b16 %v161
  %v1054 = vunpack.c.l.b16 %v162
  %v1055 = vunpack.c.l.b16 %v163
  %v1056 = vunpack.c.l.b16 %v164
  %v1057 = vunpack.c.l.b16 %v165
  %v1058 = vunpack.c.l.b16 %v166
  %v1059 = vunpack.c.l.b16 %v167
  %v1060 = vunpack.c.l.b16 %v168
  %v1061 = vunpack.c.l.b16 %v169
  %v1062 = vunpack.c.l.b16 %v170
  %v1063 = vunpack.c.l.b16 %v171
  %v1064 = vunpack.c.l.b16 %v172
  %v1065 = vunpack.c.l.b16 %v173
  %v1066 = vunpack.c.l.b16 %v174
  %v1067 = vunpack.c.l.b16 %v175
  %v1068 = vunpack.c.l.b16 %v176
  %v1069 = vunpack.c.l.b16 %v177
  %v1070 = vunpack.c.l.b16 %v178
  %v1071 = vunpack.c.l.b16 %v179
  %v1072 = vunpack.c.l.b16 %v180
  %v1073 = vunpack.c.l.b16 %v181
  %v1074 = vunpack.c.l.b16 %v182
  %v1075 = vunpack.c.l.b16 %v183
  %v1076 = vunpack.c.l.b16 %v184
  %v1077 = vunpack.c.l.b16 %v185
  %v1078 = vunpack.c.l.b16 %v186
  %v1079 = vunpack.c.l.b16 %v187
  %v1080 = vunpack.c.l.b16 %v188
  %v1081 = vunpack.c.l.b16 %v189
  %v1082 = vunpack.c.l.b16 %v190
  %v1083 = vunpack.c.l.b16 %v191
  %v1084 = vunpack.c.l.b16 %v192
  %v1085 = vunpack.c.l.b16 %v193
  %v1086 = vunpack.c.l.b16 %v194
  %v1087 = vunpack.c.l.b16 %v195
  %v1088 = vunpack.c.l.b16 %v196
  %v1089 = vunpack.c.l.b16 %v197
  %v1090 = vunpack.c.l.b16 %v198
  %v1091 = vunpack.c.l.b16 %v199
  %v1092 = vunpack.c.l.b16 %v200
  %v1093 = vunpack.c.l.b16 %v201
  %v1094 = vunpack.c.l.b16 %v202
  %v1095 = vunpack.c.l.b16 %v203
  %v1096 = vunpack.c.l.b16 %v204
  %v1097 = vunpack.c.l.b16 %v205
  %v1098 = vunpack.c.l.b16 %v206
  %v1099 = vunpack.c.l.b16 %v207
  %v1100 = vunpack.c.l.b16 %v208
  %v1101 = vunpack.c.l.b16 %v209
  %v1102 = vunpack.c.l.b16 %v210
  %v1103 = vunpack.c.l.b16 %v211
  %v1104 = vunpack.c.l.b16 %v212
  %v1105 = vunpack.c.l.b16 %v213
  %v1106 = vunpack.c.l.b16 %v214
  %v1107 = vunpack.c.l.b16 %v215
  %v1108 = vunpack.c.l.b16 %v216
  %v1109 = vunpack.c.l.b16 %v217
  %v1110 = vunpack.c.l.b16 %v218
  %v1111 = vunpack.c.l.b16 %v219
  %v1112 = vunpack.c.l.b16 %v220
  %v1113 = vunpack.c.l.b16 %v221
  %v1114 = vunpack.c.l.b16 %v222
  %v1115 = vunpack.c.l.b16 %v223
  %v1116 = vunpack.c.l.b16 %v224
  %v1117 = vunpack.c.l.b16 %v225
  %v1118 = vunpack.c.l.b16 %v226
  %v1119 = vunpack.c.l.b16 %v227
  %v1120 = vunpack.c.l.b16 %v228
  %v1121 = vunpack.c.l.b16 %v229
  %v1122 = vunpack.c.l.b16 %v230
  %v1123 = vunpack.c.l.b16 %v231
  %v1124 = vunpack.c.l.b16 %v232
  %v1125 = vunpack.c.l.b16 %v233
  %v1126 = vunpack.c.l.b16 %v234
  %v1127 = vunpack.c.l.b16 %v235
  %v1128 = vunpack.c.l.b16 %v236
  %v1129 = vunpack.c.l.b16 %v237
  %v1130 = vunpack.c.l.b16 %v238
  %v1131 = vunpack.c.l.b16 %v239
  %v1132 = vunpack.c.l.b16 %v240
  %v1133 = vunpack.c.l.b16 %v241
  %v1134 = vunpack.c.l.b16 %v242
  %v1135 = vunpack.c.l.b16 %v243
  %v1136 = vunpack.c.l.b16 %v244
  %v1137 = vunpack.c.l.b16 %v245
  %v1138 = vunpack.c.l.b16 %v246
  %v1139 = vunpack.c.l.b16 %v247
  %v1140 = vunpack.c.l.b16 %v248
  %v1141 = vunpack.c.l.b16 %v249
  %v1142 = vunpack.c.l.b16 %v250
  %v1143 = vunpack.c.l.b16 %v251
  %v1144 = vunpack.c.l.b16 %v252
  %v1145 = vunpack.c.l.b16 %v253
  %v1146 = vunpack.c.l.b16 %v254
  %v1147 = vunpack.c.l.b16 %v255
  %v1148 = vunpack.c.l.b16 %v256
  %v1149 = vunpack.c.l.b16 %v257
  %v1150 = vunpack.c.l.b16 %v258
  %v1151 = vunpack.c.l.b16 %v259
  %v1152 = vunpack.c.l.b16 %v260
  %v1153 = vunpack.c.l.b16 %v261
  %v1154 = vunpack.c.l.b16 %v262
  %v1155 = vunpack.c.l.b16 %v263
  %v1156 = vunpack.c.l.b16 %v264
  %v1157 = vunpack.c.l.b16 %v265
  %v1158 = vunpack.c.l.b16 %v266
  %v1159 = vunpack.c.l.b16 %v267
  %v1160 = vunpack.c.l.b16 %v268
  %v1161 = vunpack.c.l.b16 %v269
  %v1162 = vunpack.c.l.b16 %v270
  %v1163 = vunpack.c.l.b16 %v271
  %v1164 = vunpack.c.l.b16 %v272
  %v1165 = vunpack.c.l.b16 %v273
  %v1166 = vunpack.c.l.b16 %v274
  %v1167 = vunpack.c.l.b16 %v275
  %v1168 = vunpack.c.l.b16 %v276
  %v1169 = vunpack.c.l.b16 %v277
  %v1170 = vunpack.c.l.b16 %v278
  %v1171 = vunpack.c.l.b16 %v279
  %v1172 = vunpack.c.l.b16 %v280
  %v1173 = vunpack.c.l.b16 %v281
  %v1174 = vunpack.c.l.b16 %v282
  %v1175 = vunpack.c.l.b16 %v283
  %v1176 = vunpack.c.l.b16 %v284
  %v1177 = vunpack.c.l.b16 %v285
  %v1178 = vunpack.c.l.b16 %v286
  %v1179 = vunpack.c.l.b16 %v287
  %v1180 = vunpack.c.l.b16 %v288
  %v1181 = vunpack.c.l.b16 %v289
  %v1182 = vunpack.c.l.b16 %v290
  %v1183 = vunpack.c.l.b16 %v291
  %v1184 = vunpack.c.l.b16 %v292
  %v1185 = vunpack.c.l.b16 %v293
  %v1186 = vunpack.c.l.b16 %v294
  %v1187 = vunpack.c.l.b16 %v295
  %v1188 = vunpack.c.l.b16 %v296
  %v1189 = vunpack.c.l.b16 %v297
  %v1190 = vunpack.c.l.b16 %v298
  %v1191 = vunpack.c.l.b16 %v299
  %v1192 = vunpack.c.l.b16 %v300
  %v1193 = vunpack.c.l.b16 %v301
  %v1194 = vunpack.c.l.b16 %v302
  %v1195 = vunpack.c.l.b16 %v303
  %v1196 = vunpack.c.l.b16 %v304
  %v1197 = vunpack.c.l.b16 %v305
  %v1198 = vunpack.c.l.b16 %v306
  %v1199 = vunpack.c.l.b16 %v307
  %v1200 = vunpack.c.l.b16 %v308
  %v1201 = vunpack.c.l.b16 %v309
  %v1202 = vunpack.c.l.b16 %v310
  %v1203 = vunpack.c.l.b16 %v311
  %v1204 = vunpack.c.l.b16 %v312
  %v1205 = vunpack.c.l.b16 %v313
  %v1206 = vunpack.c.l.b16 %v314
  %v1207 = vunpack.c.l.b16 %v315
  %v1208 = vunpack.c.l.b16 %v316
  %v1209 = vunpack.c.l.b16 %v317
  %v1210 = vunpack.c.l.b16 %v318
  %v1211 = vunpack.c.l.b16 %v319
  %v1212 = vunpack.c.l.b16 %v320
  %v1213 = vunpack.c.l.b16 %v321
  %v1214 = vunpack.c.l.b16 %v322
  %v1215 = vunpack.c.l.b16 %v323
  %v1216 = vunpack.c.l.b16 %v324
  %v1217 = vunpack.c.l.b16 %v325
  %v1218 = vunpack.c.l.b16 %v326
  %v1219 = vunpack.c.l.b16 %v327
  %v1220 = vunpack.c.l.b16 %v328
  %v1221 = vunpack.c.l.b16 %v329
  %v1222 = vunpack.c.l.b16 %v330
  %v1223 = vunpack.c.l.b16 %v331
  %v1224 = vunpack.c.l.b16 %v332
  %v1225 = vunpack.c.l.b16 %v333
  %v1226 = vunpack.c.l.b16 %v334
  %v1227 = vunpack.c.l.b16 %v335
  %v1228 = vunpack.c.l.b16 %v336
  %v1229 = vunpack.c.l.b16 %v337
  %v1230 = vunpack.c.l.b16 %v338
  %v1231 = vunpack.c.l.b16 %v339
  %v1232 = vunpack.c.l.b16 %v340
  %v1233 = vunpack.c.l.b16 %v341
  %v1234 = vunpack.c.l.b16 %v342
  %v1235 = vunpack.c.l.b16 %v343
  %v1236 = vunpack.c.l.b16 %v344
  %v1237 = vunpack.c.l.b16 %v345
  %v1238 = vunpack.c.l.b16 %v346
  %v1239 = vunpack.c.l.b16 %v347
  %v1240 = vunpack.c.l.b16 %v348
  %v1241 = vunpack.c.l.b16 %v349
  %v1242 = vunpack.c.l.b16 %v350
  %v1243 = vunpack.c.l.b16 %v351
  %v1244 = vunpack.c.l.b16 %v352
  %v1245 = vunpack.c.l.b16 %v353
  %v1246 = vunpack.c.l.b16 %v354
  %v1247 = vunpack.c.l.b16 %v355
  %v1248 = vunpack.c.l.b16 %v356
  %v1249 = vunpack.c.l.b16 %v357
  %v1250 = vunpack.c.l.b16 %v358
  %v1251 = vunpack.c.l.b16 %v359
  %v1252 = vunpack.c.l.b16 %v360
  %v1253 = vunpack.c.l.b16 %v361
  %v1254 = vunpack.c.l.b16 %v362
  %v1255 = vunpack.c.l.b16 %v363
  %v1256 = vunpack.c.l.b16 %v364
  %v1257 = vunpack.c.l.b16 %v365
  %v1258 = vunpack.c.l.b16 %v366
  %v1259 = vunpack.c.l.b16 %v367
  %v1260 = vunpack.c.l.b16 %v368
  %v1261 = vunpack.c.l.b16 %v369
  %v1262 = vunpack.c.l.b16 %v370
  %v1263 = vunpack.c.l.b16 %v371
  %v1264 = vunpack.c.l.b16 %v372
  %v1265 = vunpack.c.l.b16 %v373
  %v1266 = vunpack.c.l.b16 %v374
  %v1267 = vunpack.c.l.b16 %v375
  %v1268 = vunpack.c.l.b16 %v376
  %v1269 = vunpack.c.l.b16 %v377
  %v1270 = vunpack.c.l.b16 %v378
  %v1271 = vunpack.c.l.b16 %v379
  %v1272 = vunpack.c.l.b16 %v380
  %v1273 = vunpack.c.l.b16 %v381
  %v1274 = vunpack.c.l.b16 %v382
  %v1275 = vunpack.c.l.b16 %v383
  %v1276 = vunpack.c.l.b16 %v384
  %v1277 = vunpack.c.l.b16 %v385
  %v1278 = vunpack.c.l.b16 %v386
  %v1279 = vunpack.c.l.b16 %v387
  %v1280 = vunpack.c.l.b16 %v388
  %v1281 = vunpack.c.l.b16 %v389
  %v1282 = vunpack.c.l.b16 %v390
  %v1283 = vunpack.c.l.b16 %v391
  %v1284 = vunpack.c.l.b16 %v392
  %v1285 = vunpack.c.l.b16 %v393
  %v1286 = vunpack.c.l.b16 %v394
  %v1287 = vunpack.c.l.b16 %v395
  %v1288 = vunpack.c.l.b16 %v396
  %v1289 = vunpack.c.l.b16 %v397
  %v1290 = vunpack.c.l.b16 %v398
  %v1291 = vunpack.c.l.b16 %v399
  %v1292 = vunpack.c.l.b16 %v400
  %v1293 = vunpack.c.l.b16 %v401
  %v1294 = vunpack.c.l.b16 %v402
  %v1295 = vunpack.c.l.b16 %v403
  %v1296 = vunpack.c.l.b16 %v404
  %v1297 = vunpack.c.l.b16 %v405
  %v1298 = vunpack.c.l.b16 %v406
  %v1299 = vunpack.c.l.b16 %v407
  %v1300 = vunpack.c.l.b16 %v408
  %v1301 = vunpack.c.l.b16 %v409
  %v1302 = vunpack.c.l.b16 %v410
  %v1303 = vunpack.c.l.b16 %v411
  %v1304 = vunpack.c.l.b16 %v412
  %v1305 = vunpack.c.l.b16 %v413
  %v1306 = vunpack.c.l.b16 %v414
  %v1307 = vunpack.c.l.b16 %v415
  %v1308 = vunpack.c.l.b16 %v416
  %v1309 = vunpack.c.l.b16 %v417
  %v1310 = vunpack.c.l.b16 %v418
  %v1311 = vunpack.c.l.b16 %v419
  %v1312 = vunpack.c.l.b16 %v420
  %v1313 = vunpack.c.l.b16 %v421
  %v1314 = vunpack.c.l.b16 %v422
  %v1315 = vunpack.c.l.b16 %v423
  %v1316 = vunpack.c.l.b16 %v424
  %v1317 = vpack.c.b16 %v934, %v933
  %v1318 = vpack.c.b16 %v936, %v935
  %v1319 = vpack.c.b16 %v938, %v937
  %v1320 = vpack.c.b16 %v940, %v939
  %v1321 = vpack.c.b16 %v942, %v941
  %v1322 = vpack.c.b16 %v944, %v943
  %v1323 = vpack.c.b16 %v946, %v945
  %v1324 = vpack.c.b16 %v948, %v947
  %v1325 = vpack.c.b16 %v950, %v949
  %v1326 = vpack.c.b16 %v952, %v951
  %v1327 = vpack.c.b16 %v954, %v953
  %v1328 = vpack.c.b16 %v956, %v955
  %v1329 = vpack.c.b16 %v958, %v957
  %v1330 = vpack.c.b16 %v960, %v959
  %v1331 = vpack.c.b16 %v962, %v961
  %v1332 = vpack.c.b16 %v964, %v963
  %v1333 = vpack.c.b16 %v966, %v965
  %v1334 = vpack.c.b16 %v968, %v967
  %v1335 = vpack.c.b16 %v970, %v969
  %v1336 = vpack.c.b16 %v972, %v971
  %v1337 = vpack.c.b16 %v974, %v973
  %v1338 = vpack.c.b16 %v976, %v975
  %v1339 = vpack.c.b16 %v978, %v977
  %v1340 = vpack.c.b16 %v980, %v979
  %v1341 = vpack.c.b16 %v982, %v981
  %v1342 = vpack.c.b16 %v984, %v983
  %v1343 = vpack.c.b16 %v986, %v985
  %v1344 = vpack.c.b16 %v988, %v987
  %v1345 = vpack.c.b16 %v990, %v989
  %v1346 = vpack.c.b16 %v992, %v991
  %v1347 = vpack.c.b16 %v994, %v993
  %v1348 = vpack.c.b16 %v996, %v995
  %v1349 = vpack.c.b16 %v998, %v997
  %v1350 = vpack.c.b16 %v1000, %v999
  %v1351 = vpack.c.b16 %v1002, %v1001
  %v1352 = vpack.c.b16 %v1004, %v1003
  %v1353 = vpack.c.b16 %v1006, %v1005
  %v1354 = vpack.c.b16 %v1008, %v1007
  %v1355 = vpack.c.b16 %v1010, %v1009
  %v1356 = vpack.c.b16 %v1012, %v1011
  %v1357 = vpack.c.b16 %v1014, %v1013
  %v1358 = vpack.c.b16 %v1016, %v1015
  %v1359 = vpack.c.b16 %v1018, %v1017
  %v1360 = vpack.c.b16 %v1020, %v1019
  %v1361 = vpack.c.b16 %v1022, %v1021
  %v1362 = vpack.c.b16 %v1024, %v1023
  %v1363 = vpack.c.b16 %v1026, %v1025
  %v1364 = vpack.c.b16 %v1028, %v1027
  %v1365 = vpack.c.b16 %v1030, %v1029
  %v1366 = vpack.c.b16 %v1032, %v1031
  %v1367 = vpack.c.b16 %v1034, %v1033
  %v1368 = vpack.c.b16 %v1036, %v1035
  %v1369 = vpack.c.b16 %v1038, %v1037
  %v1370 = vpack.c.b16 %v1040, %v1039
  %v1371 = vpack.c.b16 %v1042, %v1041
  %v1372 = vpack.c.b16 %v1044, %v1043
  %v1373 = vpack.c.b16 %v1046, %v1045
  %v1374 = vpack.c.b16 %v1048, %v1047
  %v1375 = vpack.c.b16 %v1050, %v1049
  %v1376 = vpack.c.b16 %v1052, %v1051
  %v1377 = vpack.c.b16 %v1054, %v1053
  %v1378 = vpack.c.b16 %v1056, %v1055
  %v1379 = vpack.c.b16 %v1058, %v1057
  %v1380 = vpack.c.b16 %v1060, %v1059
  %v1381 = vpack.c.b16 %v1062, %v1061
  %v1382 = vpack.c.b16 %v1064, %v1063
  %v1383 = vpack.c.b16 %v1066, %v1065
  %v1384 = vpack.c.b16 %v1068, %v1067
  %v1385 = vpack.c.b16 %v1070, %v1069
  %v1386 = vpack.c.b16 %v1072, %v1071
  %v1387 = vpack.c.b16 %v1074, %v1073
  %v1388 = vpack.c.b16 %v1076, %v1075
  %v1389 = vpack.c.b16 %v1078, %v1077
  %v1390 = vpack.c.b16 %v1080, %v1079
  %v1391 = vpack.c.b16 %v1082, %v1081
  %v1392 = vpack.c.b16 %v1084, %v1083
  %v1393 = vpack.c.b16 %v1086, %v1085
  %v1394 = vpack.c.b16 %v1088, %v1087
  %v1395 = vpack.c.b16 %v1090, %v1089
  %v1396 = vpack.c.b16 %v1092, %v1091
  %v1397 = vpack.c.b16 %v1094, %v1093
  %v1398 = vpack.c.b16 %v1096, %v1095
  %v1399 = vpack.c.b16 %v1098, %v1097
  %v1400 = vpack.c.b16 %v1100, %v1099
  %v1401 = vpack.c.b16 %v1102, %v1101
  %v1402 = vpack.c.b16 %v1104, %v1103
  %v1403 = vpack.c.b16 %v1106, %v1105
  %v1404 = vpack.c.b16 %v1108, %v1107
  %v1405 = vpack.c.b16 %v1110, %v1109
  %v1406 = vpack.c.b16 %v1112, %v1111
  %v1407 = vpack.c.b16 %v1114, %v1113
  %v1408 = vpack.c.b16 %v1116, %v1115
  %v1409 = vpack.c.b16 %v1118, %v1117
  %v1410 = vpack.c.b16 %v1120, %v1119
  %v1411 = vpack.c.b16 %v1122, %v1121
  %v1412 = vpack.c.b16 %v1124, %v1123
  %v1413 = vpack.c.b16 %v1126, %v1125
  %v1414 = vpack.c.b16 %v1128, %v1127
  %v1415 = vpack.c.b16 %v1130, %v1129
  %v1416 = vpack.c.b16 %v1132, %v1131
  %v1417 = vpack.c.b16 %v1134, %v1133
  %v1418 = vpack.c.b16 %v1136, %v1135
  %v1419 = vpack.c.b16 %v1138, %v1137
  %v1420 = vpack.c.b16 %v1140, %v1139
  %v1421 = vpack.c.b16 %v1142, %v1141
  %v1422 = vpack.c.b16 %v1144, %v1143
  %v1423 = vpack.c.b16 %v1146, %v1145
  %v1424 = vpack.c.b16 %v1148, %v1147
  %v1425 = vpack.c.b16 %v1150, %v1149
  %v1426 = vpack.c.b16 %v1152, %v1151
  %v1427 = vpack.c.b16 %v1154, %v1153
  %v1428 = vpack.c.b16 %v1156, %v1155
  %v1429 = vpack.c.b16 %v1158, %v1157
  %v1430 = vpack.c.b16 %v1160, %v1159
  %v1431 = vpack.c.b16 %v1162, %v1161
  %v1432 = vpack.c.b16 %v1164, %v1163
  %v1433 = vpack.c.b16 %v1166, %v1165
  %v1434 = vpack.c.b16 %v1168, %v1167
  %v1435 = vpack.c.b16 %v1170, %v1169
  %v1436 = vpack.c.b16 %v1172, %v1171
  %v1437 = vpack.c.b16 %v1174, %v1173
  %v1438 = vpack.c.b16 %v1176, %v1175
  %v1439 = vpack.c.b16 %v1178, %v1177
  %v1440 = vpack.c.b16 %v1180, %v1179
  %v1441 = vpack.c.b16 %v1182, %v1181
  %v1442 = vpack.c.b16 %v1184, %v1183
  %v1443 = vpack.c.b16 %v1186, %v1185
  %v1444 = vpack.c.b16 %v1188, %v1187
  %v1445 = vpack.c.b16 %v1190, %v1189
  %v1446 = vpack.c.b16 %v1192, %v1191
  %v1447 = vpack.c.b16 %v1194, %v1193
  %v1448 = vpack.c.b16 %v1196, %v1195
  %v1449 = vpack.c.b16 %v1198, %v1197
  %v1450 = vpack.c.b16 %v1200, %v1199
  %v1451 = vpack.c.b16 %v1202, %v1201
  %v1452 = vpack.c.b16 %v1204, %v1203
  %v1453 = vpack.c.b16 %v1206, %v1205
  %v1454 = vpack.c.b16 %v1208, %v1207
  %v1455 = vpack.c.b16 %v1210, %v1209
  %v1456 = vpack.c.b16 %v1212, %v1211
  %v1457 = vpack.c.b16 %v1214, %v1213
  %v1458 = vpack.c.b16 %v1216, %v1215
  %v1459 = vpack.c.b16 %v1218, %v1217
  %v1460 = vpack.c.b16 %v1220, %v1219
  %v1461 = vpack.c.b16 %v1222, %v1221
  %v1462 = vpack.c.b16 %v1224, %v1223
  %v1463 = vpack.c.b16 %v1226, %v1225
  %v1464 = vpack.c.b16 %v1228, %v1227
  %v1465 = vpack.c.b16 %v1230, %v1229
  %v1466 = vpack.c.b16 %v1232, %v1231
  %v1467 = vpack.c.b16 %v1234, %v1233
  %v1468 = vpack.c.b16 %v1236, %v1235
  %v1469 = vpack.c.b16 %v1238, %v1237
  %v1470 = vpack.c.b16 %v1240, %v1239
  %v1471 = vpack.c.b16 %v1242, %v1241
  %v1472 = vpack.c.b16 %v1244, %v1243
  %v1473 = vpack.c.b16 %v1246, %v1245
  %v1474 = vpack.c.b16 %v1248, %v1247
  %v1475 = vpack.c.b16 %v1250, %v1249
  %v1476 = vpack.c.b16 %v1252, %v1251
  %v1477 = vpack.c.b16 %v1254, %v1253
  %v1478 = vpack.c.b16 %v1256, %v1255
  %v1479 = vpack.c.b16 %v1258, %v1257
  %v1480 = vpack.c.b16 %v1260, %v1259
  %v1481 = vpack.c.b16 %v1262, %v1261
  %v1482 = vpack.c.b16 %v1264, %v1263
  %v1483 = vpack.c.b16 %v1266, %v1265
  %v1484 = vpack.c.b16 %v1268, %v1267
  %v1485 = vpack.c.b16 %v1270, %v1269
  %v1486 = vpack.c.b16 %v1272, %v1271
  %v1487 = vpack.c.b16 %v1274, %v1273
  %v1488 = vpack.c.b16 %v1276, %v1275
  %v1489 = vpack.c.b16 %v1278, %v1277
  %v1490 = vpack.c.b16 %v1280, %v1279
  %v1491 = vpack.c.b16 %v1282, %v1281
  %v1492 = vpack.c.b16 %v1284, %v1283
  %v1493 = vpack.c.b16 %v1286, %v1285
  %v1494 = vpack.c.b16 %v1288, %v1287
  %v1495 = vpack.c.b16 %v1290, %v1289
  %v1496 = vpack.c.b16 %v1292, %v1291
  %v1497 = vpack.c.b16 %v1294, %v1293
  %v1498 = vpack.c.b16 %v1296, %v1295
  %v1499 = vpack.c.b16 %v1298, %v1297
  %v1500 = vpack.c.b16 %v1300, %v1299
  %v1501 = vpack.c.b16 %v1302, %v1301
  %v1502 = vpack.c.b16 %v1304, %v1303
  %v1503 = vpack.c.b16 %v1306, %v1305
  %v1504 = vpack.c.b16 %v1308, %v1307
  %v1505 = vpack.c.b16 %v1310, %v1309
  %v1506 = vpack.c.b16 %v1312, %v1311
  %v1507 = vpack.c.b16 %v1314, %v1313
  %v1508 = vpack.c.b16 %v1316, %v1315
  %1701 = vmatpush.bf16.msra.mxu0 %v1324
  %1702 = vmatpush.bf16.msra.mxu0 %v1323
  %1703 = vmatpush.bf16.msra.mxu0 %v1322
  %1704 = vmatpush.bf16.msra.mxu0 %v1321
  %1705 = vmatpush.bf16.msra.mxu0 %v1320
  %1706 = vmatpush.bf16.msra.mxu0 %v1319
  %1707 = vmatpush.bf16.msra.mxu0 %v1318
  %1708 = vmatpush.bf16.msra.mxu0 %v1317
  %1709 = vmatmul.bf16.gmra.mxu0 %v501
  %v1710 = vpop.f32.mrf.mxu0
  %v1711 = vadd.f32 %v427, %v1710
  %v1712 = vpop.f32.mrf.mxu0
  %v1713 = vadd.f32 %v427, %v1712
  %1714 = vdwg.mxu0
  %1715 = vmatpush.bf16.msra.mxu0 %v1332
  %1716 = vmatpush.bf16.msra.mxu0 %v1331
  %1717 = vmatpush.bf16.msra.mxu0 %v1330
  %1718 = vmatpush.bf16.msra.mxu0 %v1329
  %1719 = vmatpush.bf16.msra.mxu0 %v1328
  %1720 = vmatpush.bf16.msra.mxu0 %v1327
  %1721 = vmatpush.bf16.msra.mxu0 %v1326
  %1722 = vmatpush.bf16.msra.mxu0 %v1325
  %1723 = vmatmul.bf16.gmra.mxu0 %v502
  %v1724 = vpop.f32.mrf.mxu0
  %v1725 = vadd.f32 %v1711, %v1724
  %v1726 = vpop.f32.mrf.mxu0
  %v1727 = vadd.f32 %v1713, %v1726
  %1728 = vdwg.mxu0
  %1729 = vmatpush.bf16.msra.mxu0 %v1340
  %1730 = vmatpush.bf16.msra.mxu0 %v1339
  %1731 = vmatpush.bf16.msra.mxu0 %v1338
  %1732 = vmatpush.bf16.msra.mxu0 %v1337
  %1733 = vmatpush.bf16.msra.mxu0 %v1336
  %1734 = vmatpush.bf16.msra.mxu0 %v1335
  %1735 = vmatpush.bf16.msra.mxu0 %v1334
  %1736 = vmatpush.bf16.msra.mxu0 %v1333
  %1737 = vmatmul.bf16.gmra.mxu0 %v503
  %v1738 = vpop.f32.mrf.mxu0
  %v1739 = vadd.f32 %v1725, %v1738
  %v1740 = vpop.f32.mrf.mxu0
  %v1741 = vadd.f32 %v1727, %v1740
  %1742 = vdwg.mxu0
  %1743 = vmatpush.bf16.msra.mxu0 %v1348
  %1744 = vmatpush.bf16.msra.mxu0 %v1347
  %1745 = vmatpush.bf16.msra.mxu0 %v1346
  %1746 = vmatpush.bf16.msra.mxu0 %v1345
  %1747 = vmatpush.bf16.msra.mxu0 %v1344
  %1748 = vmatpush.bf16.msra.mxu0 %v1343
  %1749 = vmatpush.bf16.msra.mxu0 %v1342
  %1750 = vmatpush.bf16.msra.mxu0 %v1341
  %1751 = vmatmul.bf16.gmra.mxu0 %v504
  %v1752 = vpop.f32.mrf.mxu0
  %v1753 = vadd.f32 %v1739, %v1752
  %v1754 = vpop.f32.mrf.mxu0
  %v1755 = vadd.f32 %v1741, %v1754
  %1756 = vdwg.mxu0
  %1757 = vmatpush.bf16.msra.mxu0 %v1356
  %1758 = vmatpush.bf16.msra.mxu0 %v1355
  %1759 = vmatpush.bf16.msra.mxu0 %v1354
  %1760 = vmatpush.bf16.msra.mxu0 %v1353
  %1761 = vmatpush.bf16.msra.mxu0 %v1352
  %1762 = vmatpush.bf16.msra.mxu0 %v1351
  %1763 = vmatpush.bf16.msra.mxu0 %v1350
  %1764 = vmatpush.bf16.msra.mxu0 %v1349
  %1765 = vmatmul.bf16.gmra.mxu0 %v505
  %v1766 = vpop.f32.mrf.mxu0
  %v1767 = vadd.f32 %v1753, %v1766
  %v1768 = vpop.f32.mrf.mxu0
  %v1769 = vadd.f32 %v1755, %v1768
  %1770 = vdwg.mxu0
  %1771 = vmatpush.bf16.msra.mxu0 %v1364
  %1772 = vmatpush.bf16.msra.mxu0 %v1363
  %1773 = vmatpush.bf16.msra.mxu0 %v1362
  %1774 = vmatpush.bf16.msra.mxu0 %v1361
  %1775 = vmatpush.bf16.msra.mxu0 %v1360
  %1776 = vmatpush.bf16.msra.mxu0 %v1359
  %1777 = vmatpush.bf16.msra.mxu0 %v1358
  %1778 = vmatpush.bf16.msra.mxu0 %v1357
  %1779 = vmatmul.bf16.gmra.mxu0 %v506
  %v1780 = vpop.f32.mrf.mxu0
  %v1781 = vadd.f32 %v1767, %v1780
  %v1782 = vpop.f32.mrf.mxu0
  %v1783 = vadd.f32 %v1769, %v1782
  %1784 = vdwg.mxu0
  %1785 = vmatpush.bf16.msra.mxu0 %v1372
  %1786 = vmatpush.bf16.msra.mxu0 %v1371
  %1787 = vmatpush.bf16.msra.mxu0 %v1370
  %1788 = vmatpush.bf16.msra.mxu0 %v1369
  %1789 = vmatpush.bf16.msra.mxu0 %v1368
  %1790 = vmatpush.bf16.msra.mxu0 %v1367
  %1791 = vmatpush.bf16.msra.mxu0 %v1366
  %1792 = vmatpush.bf16.msra.mxu0 %v1365
  %1793 = vmatmul.bf16.gmra.mxu0 %v507
  %v1794 = vpop.f32.mrf.mxu0
  %v1795 = vadd.f32 %v1781, %v1794
  %v1796 = vpop.f32.mrf.mxu0
  %v1797 = vadd.f32 %v1783, %v1796
  %1798 = vdwg.mxu0
  %1799 = vmatpush.bf16.msra.mxu0 %v1380
  %1800 = vmatpush.bf16.msra.mxu0 %v1379
  %1801 = vmatpush.bf16.msra.mxu0 %v1378
  %1802 = vmatpush.bf16.msra.mxu0 %v1377
  %1803 = vmatpush.bf16.msra.mxu0 %v1376
  %1804 = vmatpush.bf16.msra.mxu0 %v1375
  %1805 = vmatpush.bf16.msra.mxu0 %v1374
  %1806 = vmatpush.bf16.msra.mxu0 %v1373
  %1807 = vmatmul.bf16.gmra.mxu0 %v508
  %v1808 = vpop.f32.mrf.mxu0
  %v1809 = vadd.f32 %v1795, %v1808
  %v1810 = vpop.f32.mrf.mxu0
  %v1811 = vadd.f32 %v1797, %v1810
  %1812 = vdwg.mxu0
  %1813 = vmatpush.bf16.msra.mxu0 %v1388
  %1814 = vmatpush.bf16.msra.mxu0 %v1387
  %1815 = vmatpush.bf16.msra.mxu0 %v1386
  %1816 = vmatpush.bf16.msra.mxu0 %v1385
  %1817 = vmatpush.bf16.msra.mxu0 %v1384
  %1818 = vmatpush.bf16.msra.mxu0 %v1383
  %1819 = vmatpush.bf16.msra.mxu0 %v1382
  %1820 = vmatpush.bf16.msra.mxu0 %v1381
  %1821 = vmatmul.bf16.gmra.mxu0 %v509
  %v1822 = vpop.f32.mrf.mxu0
  %v1823 = vadd.f32 %v1809, %v1822
  %v1824 = vpop.f32.mrf.mxu0
  %v1825 = vadd.f32 %v1811, %v1824
  %1826 = vdwg.mxu0
  %1827 = vmatpush.bf16.msra.mxu0 %v1396
  %1828 = vmatpush.bf16.msra.mxu0 %v1395
  %1829 = vmatpush.bf16.msra.mxu0 %v1394
  %1830 = vmatpush.bf16.msra.mxu0 %v1393
  %1831 = vmatpush.bf16.msra.mxu0 %v1392
  %1832 = vmatpush.bf16.msra.mxu0 %v1391
  %1833 = vmatpush.bf16.msra.mxu0 %v1390
  %1834 = vmatpush.bf16.msra.mxu0 %v1389
  %1835 = vmatmul.bf16.gmra.mxu0 %v510
  %v1836 = vpop.f32.mrf.mxu0
  %v1837 = vadd.f32 %v1823, %v1836
  %v1838 = vpop.f32.mrf.mxu0
  %v1839 = vadd.f32 %v1825, %v1838
  %1840 = vdwg.mxu0
  %1841 = vmatpush.bf16.msra.mxu0 %v1404
  %1842 = vmatpush.bf16.msra.mxu0 %v1403
  %1843 = vmatpush.bf16.msra.mxu0 %v1402
  %1844 = vmatpush.bf16.msra.mxu0 %v1401
  %1845 = vmatpush.bf16.msra.mxu0 %v1400
  %1846 = vmatpush.bf16.msra.mxu0 %v1399
  %1847 = vmatpush.bf16.msra.mxu0 %v1398
  %1848 = vmatpush.bf16.msra.mxu0 %v1397
  %1849 = vmatmul.bf16.gmra.mxu0 %v511
  %v1850 = vpop.f32.mrf.mxu0
  %v1851 = vadd.f32 %v1837, %v1850
  %v1852 = vpop.f32.mrf.mxu0
  %v1853 = vadd.f32 %v1839, %v1852
  %1854 = vdwg.mxu0
  %1855 = vmatpush.bf16.msra.mxu0 %v1412
  %1856 = vmatpush.bf16.msra.mxu0 %v1411
  %1857 = vmatpush.bf16.msra.mxu0 %v1410
  %1858 = vmatpush.bf16.msra.mxu0 %v1409
  %1859 = vmatpush.bf16.msra.mxu0 %v1408
  %1860 = vmatpush.bf16.msra.mxu0 %v1407
  %1861 = vmatpush.bf16.msra.mxu0 %v1406
  %1862 = vmatpush.bf16.msra.mxu0 %v1405
  %1863 = vmatmul.bf16.gmra.mxu0 %v512
  %v1864 = vpop.f32.mrf.mxu0
  %v1865 = vadd.f32 %v1851, %v1864
  %v1866 = vpop.f32.mrf.mxu0
  %v1867 = vadd.f32 %v1853, %v1866
  %1868 = vdwg.mxu0
  %1869 = vmatpush.bf16.msra.mxu0 %v1420
  %1870 = vmatpush.bf16.msra.mxu0 %v1419
  %1871 = vmatpush.bf16.msra.mxu0 %v1418
  %1872 = vmatpush.bf16.msra.mxu0 %v1417
  %1873 = vmatpush.bf16.msra.mxu0 %v1416
  %1874 = vmatpush.bf16.msra.mxu0 %v1415
  %1875 = vmatpush.bf16.msra.mxu0 %v1414
  %1876 = vmatpush.bf16.msra.mxu0 %v1413
  %1877 = vmatmul.bf16.gmra.mxu0 %v513
  %v1878 = vpop.f32.mrf.mxu0
  %v1879 = vadd.f32 %v1865, %v1878
  %v1880 = vpop.f32.mrf.mxu0
  %v1881 = vadd.f32 %v1867, %v1880
  %1882 = vdwg.mxu0
  %1883 = vmatpush.bf16.msra.mxu0 %v1428
  %1884 = vmatpush.bf16.msra.mxu0 %v1427
  %1885 = vmatpush.bf16.msra.mxu0 %v1426
  %1886 = vmatpush.bf16.msra.mxu0 %v1425
  %1887 = vmatpush.bf16.msra.mxu0 %v1424
  %1888 = vmatpush.bf16.msra.mxu0 %v1423
  %1889 = vmatpush.bf16.msra.mxu0 %v1422
  %1890 = vmatpush.bf16.msra.mxu0 %v1421
  %1891 = vmatmul.bf16.gmra.mxu0 %v514
  %v1892 = vpop.f32.mrf.mxu0
  %v1893 = vadd.f32 %v1879, %v1892
  %v1894 = vpop.f32.mrf.mxu0
  %v1895 = vadd.f32 %v1881, %v1894
  %1896 = vdwg.mxu0
  %1897 = vmatpush.bf16.msra.mxu0 %v1436
  %1898 = vmatpush.bf16.msra.mxu0 %v1435
  %1899 = vmatpush.bf16.msra.mxu0 %v1434
  %1900 = vmatpush.bf16.msra.mxu0 %v1433
  %1901 = vmatpush.bf16.msra.mxu0 %v1432
  %1902 = vmatpush.bf16.msra.mxu0 %v1431
  %1903 = vmatpush.bf16.msra.mxu0 %v1430
  %1904 = vmatpush.bf16.msra.mxu0 %v1429
  %1905 = vmatmul.bf16.gmra.mxu0 %v515
  %v1906 = vpop.f32.mrf.mxu0
  %v1907 = vadd.f32 %v1893, %v1906
  %v1908 = vpop.f32.mrf.mxu0
  %v1909 = vadd.f32 %v1895, %v1908
  %1910 = vdwg.mxu0
  %1911 = vmatpush.bf16.msra.mxu0 %v1444
  %1912 = vmatpush.bf16.msra.mxu0 %v1443
  %1913 = vmatpush.bf16.msra.mxu0 %v1442
  %1914 = vmatpush.bf16.msra.mxu0 %v1441
  %1915 = vmatpush.bf16.msra.mxu0 %v1440
  %1916 = vmatpush.bf16.msra.mxu0 %v1439
  %1917 = vmatpush.bf16.msra.mxu0 %v1438
  %1918 = vmatpush.bf16.msra.mxu0 %v1437
  %1919 = vmatmul.bf16.gmra.mxu0 %v516
  %v1920 = vpop.f32.mrf.mxu0
  %v1921 = vadd.f32 %v1907, %v1920
  %v1922 = vpop.f32.mrf.mxu0
  %v1923 = vadd.f32 %v1909, %v1922
  %1924 = vdwg.mxu0
  %1925 = vmatpush.bf16.msra.mxu0 %v1452
  %1926 = vmatpush.bf16.msra.mxu0 %v1451
  %1927 = vmatpush.bf16.msra.mxu0 %v1450
  %1928 = vmatpush.bf16.msra.mxu0 %v1449
  %1929 = vmatpush.bf16.msra.mxu0 %v1448
  %1930 = vmatpush.bf16.msra.mxu0 %v1447
  %1931 = vmatpush.bf16.msra.mxu0 %v1446
  %1932 = vmatpush.bf16.msra.mxu0 %v1445
  %1933 = vmatmul.bf16.gmra.mxu0 %v517
  %v1934 = vpop.f32.mrf.mxu0
  %v1935 = vadd.f32 %v1921, %v1934
  %v1936 = vpop.f32.mrf.mxu0
  %v1937 = vadd.f32 %v1923, %v1936
  %1938 = vdwg.mxu0
  %1939 = vmatpush.bf16.msra.mxu0 %v1460
  %1940 = vmatpush.bf16.msra.mxu0 %v1459
  %1941 = vmatpush.bf16.msra.mxu0 %v1458
  %1942 = vmatpush.bf16.msra.mxu0 %v1457
  %1943 = vmatpush.bf16.msra.mxu0 %v1456
  %1944 = vmatpush.bf16.msra.mxu0 %v1455
  %1945 = vmatpush.bf16.msra.mxu0 %v1454
  %1946 = vmatpush.bf16.msra.mxu0 %v1453
  %1947 = vmatmul.bf16.gmra.mxu0 %v518
  %v1948 = vpop.f32.mrf.mxu0
  %v1949 = vadd.f32 %v1935, %v1948
  %v1950 = vpop.f32.mrf.mxu0
  %v1951 = vadd.f32 %v1937, %v1950
  %1952 = vdwg.mxu0
  %1953 = vmatpush.bf16.msra.mxu0 %v1468
  %1954 = vmatpush.bf16.msra.mxu0 %v1467
  %1955 = vmatpush.bf16.msra.mxu0 %v1466
  %1956 = vmatpush.bf16.msra.mxu0 %v1465
  %1957 = vmatpush.bf16.msra.mxu0 %v1464
  %1958 = vmatpush.bf16.msra.mxu0 %v1463
  %1959 = vmatpush.bf16.msra.mxu0 %v1462
  %1960 = vmatpush.bf16.msra.mxu0 %v1461
  %1961 = vmatmul.bf16.gmra.mxu0 %v519
  %v1962 = vpop.f32.mrf.mxu0
  %v1963 = vadd.f32 %v1949, %v1962
  %v1964 = vpop.f32.mrf.mxu0
  %v1965 = vadd.f32 %v1951, %v1964
  %1966 = vdwg.mxu0
  %1967 = vmatpush.bf16.msra.mxu0 %v1476
  %1968 = vmatpush.bf16.msra.mxu0 %v1475
  %1969 = vmatpush.bf16.msra.mxu0 %v1474
  %1970 = vmatpush.bf16.msra.mxu0 %v1473
  %1971 = vmatpush.bf16.msra.mxu0 %v1472
  %1972 = vmatpush.bf16.msra.mxu0 %v1471
  %1973 = vmatpush.bf16.msra.mxu0 %v1470
  %1974 = vmatpush.bf16.msra.mxu0 %v1469
  %1975 = vmatmul.bf16.gmra.mxu0 %v520
  %v1976 = vpop.f32.mrf.mxu0
  %v1977 = vadd.f32 %v1963, %v1976
  %v1978 = vpop.f32.mrf.mxu0
  %v1979 = vadd.f32 %v1965, %v1978
  %1980 = vdwg.mxu0
  %1981 = vmatpush.bf16.msra.mxu0 %v1484
  %1982 = vmatpush.bf16.msra.mxu0 %v1483
  %1983 = vmatpush.bf16.msra.mxu0 %v1482
  %1984 = vmatpush.bf16.msra.mxu0 %v1481
  %1985 = vmatpush.bf16.msra.mxu0 %v1480
  %1986 = vmatpush.bf16.msra.mxu0 %v1479
  %1987 = vmatpush.bf16.msra.mxu0 %v1478
  %1988 = vmatpush.bf16.msra.mxu0 %v1477
  %1989 = vmatmul.bf16.gmra.mxu0 %v521
  %v1990 = vpop.f32.mrf.mxu0
  %v1991 = vadd.f32 %v1977, %v1990
  %v1992 = vpop.f32.mrf.mxu0
  %v1993 = vadd.f32 %v1979, %v1992
  %1994 = vdwg.mxu0
  %1995 = vmatpush.bf16.msra.mxu0 %v1492
  %1996 = vmatpush.bf16.msra.mxu0 %v1491
  %1997 = vmatpush.bf16.msra.mxu0 %v1490
  %1998 = vmatpush.bf16.msra.mxu0 %v1489
  %1999 = vmatpush.bf16.msra.mxu0 %v1488
  %2000 = vmatpush.bf16.msra.mxu0 %v1487
  %2001 = vmatpush.bf16.msra.mxu0 %v1486
  %2002 = vmatpush.bf16.msra.mxu0 %v1485
  %2003 = vmatmul.bf16.gmra.mxu0 %v522
  %v2004 = vpop.f32.mrf.mxu0
  %v2005 = vadd.f32 %v1991, %v2004
  %v2006 = vpop.f32.mrf.mxu0
  %v2007 = vadd.f32 %v1993, %v2006
  %2008 = vdwg.mxu0
  %2009 = vmatpush.bf16.msra.mxu0 %v1500
  %2010 = vmatpush.bf16.msra.mxu0 %v1499
  %2011 = vmatpush.bf16.msra.mxu0 %v1498
  %2012 = vmatpush.bf16.msra.mxu0 %v1497
  %2013 = vmatpush.bf16.msra.mxu0 %v1496
  %2014 = vmatpush.bf16.msra.mxu0 %v1495
  %2015 = vmatpush.bf16.msra.mxu0 %v1494
  %2016 = vmatpush.bf16.msra.mxu0 %v1493
  %2017 = vmatmul.bf16.gmra.mxu0 %v523
  %v2018 = vpop.f32.mrf.mxu0
  %v2019 = vadd.f32 %v2005, %v2018
  %v2020 = vpop.f32.mrf.mxu0
  %v2021 = vadd.f32 %v2007, %v2020
  %2022 = vdwg.mxu0
  %2023 = vmatpush.bf16.msra.mxu0 %v1508
  %2024 = vmatpush.bf16.msra.mxu0 %v1507
  %2025 = vmatpush.bf16.msra.mxu0 %v1506
  %2026 = vmatpush.bf16.msra.mxu0 %v1505
  %2027 = vmatpush.bf16.msra.mxu0 %v1504
  %2028 = vmatpush.bf16.msra.mxu0 %v1503
  %2029 = vmatpush.bf16.msra.mxu0 %v1502
  %2030 = vmatpush.bf16.msra.mxu0 %v1501
  %2031 = vmatmul.bf16.gmra.mxu0 %v524
  %v2032 = vpop.f32.mrf.mxu0
  %v2033 = vadd.f32 %v2019, %v2032
  %v2034 = vpop.f32.mrf.mxu0
  %v2035 = vadd.f32 %v2021, %v2034
  %2036 = vdwg.mxu0
  %v2037 = vmul.f32 %v2033, %v2033
  %v2038 = vmul.f32 %v2035, %v2035
  %2039 = vadd.xlane.f32.xlu0 %v2037
  %v2040 = vpop.xlane.xlu0 %2039
  %2041 = vadd.xlane.f32.xlu0 %v2038
  %v2042 = vpop.xlane.xlu0 %2041
  %v2043 = vmax.f32 %v2040, 1e-16
  %v2044 = vmax.f32 %v2042, 1e-16
  %v2045 = vrsqrt.pop %v2043
  %v2046 = vmul.f32 %v2045, %v2043
  %v2047 = vmul.f32 %v2046, %v2045
  %v2048 = vmul.f32 0.5, %v2047
  %v2049 = vsub.f32 1.5, %v2048
  %v2050 = vmul.f32 %v2045, %v2049
  %vm2051 = vweird.f32 %v2043
  %vm2052 = vweird.f32 %v2045
  %vm2053 = vmor %vm2051, %vm2052
  %v2054 = vsel %vm2053, %v2045, %v2050
  %v2055 = vrsqrt.pop %v2044
  %v2056 = vmul.f32 %v2055, %v2044
  %v2057 = vmul.f32 %v2056, %v2055
  %v2058 = vmul.f32 0.5, %v2057
  %v2059 = vsub.f32 1.5, %v2058
  %v2060 = vmul.f32 %v2055, %v2059
  %vm2061 = vweird.f32 %v2044
  %vm2062 = vweird.f32 %v2055
  %vm2063 = vmor %vm2061, %vm2062
  %v2064 = vsel %vm2063, %v2055, %v2060
  %v2065 = vpack.c.bf16 %v2035, %v2033
  %v2066 = vld [vmem:[%s3] sm:$0xf]
  %v2067 = vld [vmem:[%s3 + $0x4] sm:$0xf]
  %v2068 = vld [vmem:[%s3 + $0x8] sm:$0xf]
  %v2069 = vld [vmem:[%s3 + $0xc] sm:$0xf]
  %v2070 = vld [vmem:[%s3 + $0x10] sm:$0xf]
  %v2071 = vld [vmem:[%s3 + $0x14] sm:$0xf]
  %v2072 = vld [vmem:[%s3 + $0x18] sm:$0xf]
  %v2073 = vld [vmem:[%s3 + $0x1c] sm:$0xf]
  %v2074 = vld [vmem:[%s3 + $0x20] sm:$0xf]
  %v2075 = vld [vmem:[%s3 + $0x24] sm:$0xf]
  %v2076 = vld [vmem:[%s3 + $0x28] sm:$0xf]
  %v2077 = vld [vmem:[%s3 + $0x2c] sm:$0xf]
  %v2078 = vld [vmem:[%s3 + $0x30] sm:$0xf]
  %v2079 = vld [vmem:[%s3 + $0x34] sm:$0xf]
  %v2080 = vld [vmem:[%s3 + $0x38] sm:$0xf]
  %v2081 = vld [vmem:[%s3 + $0x3c] sm:$0xf]
  %v2098 = vunpack.c.l.b16 %v2066
  %v2099 = vunpack.c.l.b16 %v2067
  %v2100 = vunpack.c.l.b16 %v2068
  %v2101 = vunpack.c.l.b16 %v2069
  %v2102 = vunpack.c.l.b16 %v2070
  %v2103 = vunpack.c.l.b16 %v2071
  %v2104 = vunpack.c.l.b16 %v2072
  %v2105 = vunpack.c.l.b16 %v2073
  %v2106 = vunpack.c.l.b16 %v2074
  %v2107 = vunpack.c.l.b16 %v2075
  %v2108 = vunpack.c.l.b16 %v2076
  %v2109 = vunpack.c.l.b16 %v2077
  %v2110 = vunpack.c.l.b16 %v2078
  %v2111 = vunpack.c.l.b16 %v2079
  %v2112 = vunpack.c.l.b16 %v2080
  %v2113 = vunpack.c.l.b16 %v2081
  %v2114 = vpack.c.b16 %v2099, %v2098
  %v2115 = vpack.c.b16 %v2101, %v2100
  %v2116 = vpack.c.b16 %v2103, %v2102
  %v2117 = vpack.c.b16 %v2105, %v2104
  %v2118 = vpack.c.b16 %v2107, %v2106
  %v2119 = vpack.c.b16 %v2109, %v2108
  %v2120 = vpack.c.b16 %v2111, %v2110
  %v2121 = vpack.c.b16 %v2113, %v2112
  %2130 = vmatpush.bf16.msra.mxu0 %v2121
  %2131 = vmatpush.bf16.msra.mxu0 %v2120
  %2132 = vmatpush.bf16.msra.mxu0 %v2119
  %2133 = vmatpush.bf16.msra.mxu0 %v2118
  %2134 = vmatpush.bf16.msra.mxu0 %v2117
  %2135 = vmatpush.bf16.msra.mxu0 %v2116
  %2136 = vmatpush.bf16.msra.mxu0 %v2115
  %2137 = vmatpush.bf16.msra.mxu0 %v2114
  %2138 = vmatmul.bf16.gmra.mxu0 %v2065
  %v2139 = vpop.f32.mrf.mxu0
  %v2140 = vadd.f32 0.0, %v2139
  %v2141 = vpop.f32.mrf.mxu0
  %v2142 = vadd.f32 0.0, %v2141
  %2143 = vdwg.mxu0
  %v2144 = vmul.f32 %v2140, %v2054
  %v2145 = vmul.f32 %v2142, %v2064
  %2146 = vst [vmem:[%s4] sm:$0xff] %v2144
  %2147 = vst [vmem:[%s4 + $0x8] sm:$0xff] %v2145
  // Predicated region
  $region18: #{clip_forward.1} parent=0 // pred_check
    _
  $region19: #{clip_forward.1} parent=0 // pred_check_branch
    %2149 = sbr.rel (0) target = $region21
  $region20: #{clip_forward.1} parent=0 // pred_region
    _
  $region21: #{clip_forward.1} parent=0 // pred_fallthru
    _
  // Predicated region
  $region22: #{clip_forward.1} parent=0 // pred_check
    _
  $region23: #{clip_forward.1} parent=0 // pred_check_branch
    %2151 = sbr.rel (0) target = $region25
  $region24: #{clip_forward.1} parent=0 // pred_region
    _
  $region25: #{clip_forward.1} parent=0 // pred_fallthru
    _

</llo_original>
